<compile_context>
chip_gen: v5e
topology: v5e:2x2
jax: 0.10.0
libtpu: 0.0.40
codegen_flags: <defaults>
</compile_context>

<pallas_src>
import math
import jax
import jax.numpy as jnp
from jax.experimental import pallas as pl
from jax.experimental.pallas import tpu as pltpu

# ---- model hyper-params (small, consistent with the module's __init__) -----
VOCAB = 64
N_SEG = 2
MAX_LEN = 8          # seq length
EMBED = 32           # embed_dim
N_LAYERS = 2
HEADS = 4            # attn_heads
HEAD_DIM = EMBED // HEADS
FFN = EMBED * 4      # dim_feedforward
EPS = 1e-5           # LayerNorm eps (PyTorch default)

MATMUL_DTYPE = jnp.bfloat16   # MXU operand dtype (accumulation stays f32)
WEIGHT_DTYPE = jnp.bfloat16   # storage dtype for the big matmul weight slabs


# ---------------------------- fused Pallas kernel ----------------------------
def _bert_fused_kernel(tok_ref, sgm_ref, pos_ref,
                       win_ref, bin_ref, wout_ref, bout_ref,
                       g1_ref, bn1_ref, w1_ref, bf1_ref, w2_ref, bf2_ref,
                       g2_ref, bn2_ref, o_ref):
    """Grid step l = one nn.TransformerEncoderLayer (post-LN, relu).

    The output block is VMEM-resident across the whole grid (same block index
    every step), so it doubles as the layer-to-layer activation carrier.
    """
    layer = pl.program_id(0)

    # Step 0: fold the three-way embedding add (no standalone embedding kernel).
    @pl.when(layer == 0)
    def _():
        o_ref[...] = tok_ref[...] + sgm_ref[...] + pos_ref[...]

    x = o_ref[...]                                        # (L, E) f32, resident

    win, b_in = win_ref[0], bin_ref[0]
    wout, b_out = wout_ref[0], bout_ref[0]
    g1, b1 = g1_ref[0], bn1_ref[0]
    w1, bf1 = w1_ref[0], bf1_ref[0]
    w2, bf2 = w2_ref[0], bf2_ref[0]
    g2, b2 = g2_ref[0], bn2_ref[0]

    def mm(a, b):                                         # bf16 MXU, f32 accum
        return jnp.dot(a.astype(MATMUL_DTYPE), b.astype(MATMUL_DTYPE),
                       preferred_element_type=jnp.float32)

    # --- multi-head self-attention (in-proj, per-head attn, out-proj) ---
    qkv = mm(x, win) + b_in                               # (L, 3E) f32
    q = qkv[:, 0:EMBED]
    k = qkv[:, EMBED:2 * EMBED]
    v = qkv[:, 2 * EMBED:3 * EMBED]
    scale = 1.0 / math.sqrt(HEAD_DIM)

    heads = []
    for h in range(HEADS):                                # static unroll
        sl = slice(h * HEAD_DIM, (h + 1) * HEAD_DIM)
        qh = (q[:, sl] * scale).astype(MATMUL_DTYPE)      # (L, hd)
        kh = k[:, sl].astype(MATMUL_DTYPE)
        vh = v[:, sl].astype(MATMUL_DTYPE)
        # contract feature dims directly -> no explicit transpose (XLU-free)
        scores = jax.lax.dot_general(
            qh, kh, (((1,), (1,)), ((), ())),
            preferred_element_type=jnp.float32)           # (L, L) f32
        scores = scores - jnp.max(scores, axis=-1, keepdims=True)
        p = jnp.exp(scores)                               # f32 softmax
        p = p * pl.reciprocal(jnp.sum(p, axis=-1, keepdims=True), approx=True)
        heads.append(jnp.dot(p.astype(MATMUL_DTYPE), vh,
                             preferred_element_type=jnp.float32))
    attn = jnp.concatenate(heads, axis=-1)                # (L, E), in vregs
    attn = mm(attn, wout) + b_out

    # --- residual + LayerNorm1 (f32) ---
    y = x + attn
    mu = jnp.mean(y, axis=-1, keepdims=True)
    var = jnp.mean((y - mu) ** 2, axis=-1, keepdims=True)
    y = (y - mu) * jax.lax.rsqrt(var + EPS) * g1 + b1

    # --- feed-forward (linear -> relu -> linear) ---
    h1 = jnp.maximum(mm(y, w1) + bf1, 0.0)
    ff = mm(h1, w2) + bf2

    # --- residual + LayerNorm2 (f32) ---
    z = y + ff
    mu2 = jnp.mean(z, axis=-1, keepdims=True)
    var2 = jnp.mean((z - mu2) ** 2, axis=-1, keepdims=True)
    o_ref[...] = (z - mu2) * jax.lax.rsqrt(var2 + EPS) * g2 + b2


# ------------------------------ wrapper ---------------------------------------
def bert_forward(seq, seg, params):
    # Embedding gathers are plain-XLA glue; the add and every encoder layer
    # run inside one fused pallas_call.
    tok = jnp.take(params["tok_embed"], seq, axis=0)      # (L, E) f32
    sgm = jnp.take(params["seg_embed"], seg, axis=0)      # (L, E) f32
    pos = params["pos_embed"]                             # (L, E) f32
    L, E = tok.shape

    stk = params["stacked"]
    weight_names = ["win_t", "bin", "wout_t", "bout", "g1", "bn1",
                    "w1_t", "bf1", "w2_t", "bf2", "g2", "bn2"]
    weights = [stk[n] for n in weight_names]

    act_spec = pl.BlockSpec((L, E), lambda l: (0, 0))

    def w_spec(a):
        # one layer's slice of the stacked weight per grid step
        return pl.BlockSpec((1,) + a.shape[1:], lambda l: (l, 0, 0))

    return pl.pallas_call(
        _bert_fused_kernel,
        out_shape=jax.ShapeDtypeStruct((L, E), jnp.float32),
        grid=(N_LAYERS,),
        in_specs=[act_spec, act_spec, act_spec] + [w_spec(a) for a in weights],
        # same block index every step -> activation stays VMEM-resident
        out_specs=pl.BlockSpec((L, E), lambda l: (0, 0)),
        compiler_params=pltpu.CompilerParams(
            dimension_semantics=("arbitrary",)),          # layer axis is sequential
    )(tok, sgm, pos, *weights)


# --------------------------- parameter init ----------------------------------
def init_params(key):
    def nrm(k, shape, dtype=jnp.float32, scale=0.02):
        return (scale * jax.random.normal(k, shape)).astype(dtype)

    k_emb, k_lay = jax.random.split(key)
    k_tok, k_seg, k_pos = jax.random.split(k_emb, 3)
    lk = jax.random.split(k_lay, 8)
    return {
        "tok_embed": nrm(k_tok, (VOCAB, EMBED)),
        "seg_embed": nrm(k_seg, (N_SEG, EMBED)),
        "pos_embed": nrm(k_pos, (MAX_LEN, EMBED)),
        # Per-layer weights stacked on a leading layer axis (the grid indexes
        # it). Weights are stored pre-transposed so the kernel computes
        # x @ W_t (== x @ W.T). The big matmul slabs are stored bf16 (MXU
        # operand dtype) to halve weight DMA; biases / LN params stay f32.
        "stacked": {
            "win_t":  nrm(lk[0], (N_LAYERS, EMBED, 3 * EMBED), WEIGHT_DTYPE),
            "bin":    nrm(lk[1], (N_LAYERS, 1, 3 * EMBED)),
            "wout_t": nrm(lk[2], (N_LAYERS, EMBED, EMBED), WEIGHT_DTYPE),
            "bout":   nrm(lk[3], (N_LAYERS, 1, EMBED)),
            "w1_t":   nrm(lk[4], (N_LAYERS, EMBED, FFN), WEIGHT_DTYPE),
            "bf1":    nrm(lk[5], (N_LAYERS, 1, FFN)),
            "w2_t":   nrm(lk[6], (N_LAYERS, FFN, EMBED), WEIGHT_DTYPE),
            "bf2":    nrm(lk[7], (N_LAYERS, 1, EMBED)),
            # LayerNorm affine params (PyTorch default init)
            "g1":  jnp.ones((N_LAYERS, 1, EMBED), jnp.float32),
            "bn1": jnp.zeros((N_LAYERS, 1, EMBED), jnp.float32),
            "g2":  jnp.ones((N_LAYERS, 1, EMBED), jnp.float32),
            "bn2": jnp.zeros((N_LAYERS, 1, EMBED), jnp.float32),
        },
    }


# --------------------------------- main ---------------------------------------
if __name__ == "__main__":
    root = jax.random.PRNGKey(0)
    pkey, skey, gkey = jax.random.split(root, 3)

    params = init_params(pkey)
    seq = jax.random.randint(skey, (MAX_LEN,), 0, VOCAB, dtype=jnp.int32)
    seg = jax.random.randint(gkey, (MAX_LEN,), 0, N_SEG, dtype=jnp.int32)

    out = jax.jit(bert_forward)(seq, seg, params)
    out = jax.block_until_ready(out)

    assert out.shape == (MAX_LEN, EMBED) and out.dtype == jnp.float32
    assert bool(jnp.all(jnp.isfinite(out)))
    print("KERNEL_OK")
</pallas_src>

<mosaic_0001>
module attributes {stable_mosaic.version = 11 : i64} {
  func.func @_bert_fused_kernel(%arg0: i32, %arg1: memref<8x32xf32, #tpu.memory_space<vmem>>, %arg2: memref<8x32xf32, #tpu.memory_space<vmem>>, %arg3: memref<8x32xf32, #tpu.memory_space<vmem>>, %arg4: memref<1x32x96xbf16, #tpu.memory_space<vmem>>, %arg5: memref<1x1x96xf32, #tpu.memory_space<vmem>>, %arg6: memref<1x32x32xbf16, #tpu.memory_space<vmem>>, %arg7: memref<1x1x32xf32, #tpu.memory_space<vmem>>, %arg8: memref<1x1x32xf32, #tpu.memory_space<vmem>>, %arg9: memref<1x1x32xf32, #tpu.memory_space<vmem>>, %arg10: memref<1x32x128xbf16, #tpu.memory_space<vmem>>, %arg11: memref<1x1x128xf32, #tpu.memory_space<vmem>>, %arg12: memref<1x128x32xbf16, #tpu.memory_space<vmem>>, %arg13: memref<1x1x32xf32, #tpu.memory_space<vmem>>, %arg14: memref<1x1x32xf32, #tpu.memory_space<vmem>>, %arg15: memref<1x1x32xf32, #tpu.memory_space<vmem>>, %arg16: memref<8x32xf32, #tpu.memory_space<vmem>>) attributes {dimension_semantics = [#tpu.dimension_semantics<arbitrary>], iteration_bounds = array<i64: 2>, scalar_prefetch = 0 : i64, scratch_operands = 0 : i64, tpu.core_type = #tpu.core_type<tc>, window_params = [{pipeline_mode = #tpu.pipeline_mode<synchronous>, transform_indices = @transform_0, window_bounds = array<i64: 8, 32>}, {pipeline_mode = #tpu.pipeline_mode<synchronous>, transform_indices = @transform_1, window_bounds = array<i64: 8, 32>}, {pipeline_mode = #tpu.pipeline_mode<synchronous>, transform_indices = @transform_2, window_bounds = array<i64: 8, 32>}, {transform_indices = @transform_3, window_bounds = array<i64: 1, 32, 96>}, {transform_indices = @transform_4, window_bounds = array<i64: 1, 1, 96>}, {transform_indices = @transform_5, window_bounds = array<i64: 1, 32, 32>}, {transform_indices = @transform_6, window_bounds = array<i64: 1, 1, 32>}, {transform_indices = @transform_7, window_bounds = array<i64: 1, 1, 32>}, {transform_indices = @transform_8, window_bounds = array<i64: 1, 1, 32>}, {transform_indices = @transform_9, window_bounds = array<i64: 1, 32, 128>}, {transform_indices = @transform_10, window_bounds = array<i64: 1, 1, 128>}, {transform_indices = @transform_11, window_bounds = array<i64: 1, 128, 32>}, {transform_indices = @transform_12, window_bounds = array<i64: 1, 1, 32>}, {transform_indices = @transform_13, window_bounds = array<i64: 1, 1, 32>}, {transform_indices = @transform_14, window_bounds = array<i64: 1, 1, 32>}, {pipeline_mode = #tpu.pipeline_mode<synchronous>, transform_indices = @transform_15, window_bounds = array<i64: 8, 32>}]} {
    %c0_i32 = arith.constant 0 : i32
    %0 = arith.cmpi eq, %arg0, %c0_i32 : i32
    %1 = arith.extui %0 : i1 to i32
    %c0_i32_0 = arith.constant 0 : i32
    %2 = arith.cmpi ne, %1, %c0_i32_0 : i32
    scf.if %2 {
      %c0_74 = arith.constant 0 : index
      %c0_75 = arith.constant 0 : index
      %181 = vector.load %arg1[%c0_74, %c0_75] : memref<8x32xf32, #tpu.memory_space<vmem>>, vector<8x32xf32>
      %c0_76 = arith.constant 0 : index
      %c0_77 = arith.constant 0 : index
      %182 = vector.load %arg2[%c0_76, %c0_77] : memref<8x32xf32, #tpu.memory_space<vmem>>, vector<8x32xf32>
      %183 = arith.addf %181, %182 : vector<8x32xf32>
      %c0_78 = arith.constant 0 : index
      %c0_79 = arith.constant 0 : index
      %184 = vector.load %arg3[%c0_78, %c0_79] : memref<8x32xf32, #tpu.memory_space<vmem>>, vector<8x32xf32>
      %185 = arith.addf %183, %184 : vector<8x32xf32>
      %c0_80 = arith.constant 0 : index
      %c0_81 = arith.constant 0 : index
      %186 = vector.load %arg16[%c0_80, %c0_81] : memref<8x32xf32, #tpu.memory_space<vmem>>, vector<8x32xf32>
      tpu.vector_store %arg16[%c0_80, %c0_81], %185 {strides = array<i32>} : memref<8x32xf32, #tpu.memory_space<vmem>>, vector<8x32xf32>,
    } else {
    }
    %c0 = arith.constant 0 : index
    %c0_1 = arith.constant 0 : index
    %3 = vector.load %arg16[%c0, %c0_1] : memref<8x32xf32, #tpu.memory_space<vmem>>, vector<8x32xf32>
    %c0_2 = arith.constant 0 : index
    %c0_3 = arith.constant 0 : index
    %c0_4 = arith.constant 0 : index
    %4 = vector.load %arg4[%c0_2, %c0_3, %c0_4] : memref<1x32x96xbf16, #tpu.memory_space<vmem>>, vector<1x32x96xbf16>
    %5 = vector.shape_cast %4 : vector<1x32x96xbf16> to vector<32x96xbf16>
    %c0_5 = arith.constant 0 : index
    %c0_6 = arith.constant 0 : index
    %c0_7 = arith.constant 0 : index
    %6 = vector.load %arg5[%c0_5, %c0_6, %c0_7] : memref<1x1x96xf32, #tpu.memory_space<vmem>>, vector<1x1x96xf32>
    %7 = vector.shape_cast %6 : vector<1x1x96xf32> to vector<1x96xf32>
    %c0_8 = arith.constant 0 : index
    %c0_9 = arith.constant 0 : index
    %c0_10 = arith.constant 0 : index
    %8 = vector.load %arg6[%c0_8, %c0_9, %c0_10] : memref<1x32x32xbf16, #tpu.memory_space<vmem>>, vector<1x32x32xbf16>
    %9 = vector.shape_cast %8 : vector<1x32x32xbf16> to vector<32x32xbf16>
    %c0_11 = arith.constant 0 : index
    %c0_12 = arith.constant 0 : index
    %c0_13 = arith.constant 0 : index
    %10 = vector.load %arg7[%c0_11, %c0_12, %c0_13] : memref<1x1x32xf32, #tpu.memory_space<vmem>>, vector<1x1x32xf32>
    %11 = vector.shape_cast %10 : vector<1x1x32xf32> to vector<1x32xf32>
    %c0_14 = arith.constant 0 : index
    %c0_15 = arith.constant 0 : index
    %c0_16 = arith.constant 0 : index
    %12 = vector.load %arg8[%c0_14, %c0_15, %c0_16] : memref<1x1x32xf32, #tpu.memory_space<vmem>>, vector<1x1x32xf32>
    %13 = vector.shape_cast %12 : vector<1x1x32xf32> to vector<1x32xf32>
    %c0_17 = arith.constant 0 : index
    %c0_18 = arith.constant 0 : index
    %c0_19 = arith.constant 0 : index
    %14 = vector.load %arg9[%c0_17, %c0_18, %c0_19] : memref<1x1x32xf32, #tpu.memory_space<vmem>>, vector<1x1x32xf32>
    %15 = vector.shape_cast %14 : vector<1x1x32xf32> to vector<1x32xf32>
    %c0_20 = arith.constant 0 : index
    %c0_21 = arith.constant 0 : index
    %c0_22 = arith.constant 0 : index
    %16 = vector.load %arg10[%c0_20, %c0_21, %c0_22] : memref<1x32x128xbf16, #tpu.memory_space<vmem>>, vector<1x32x128xbf16>
    %17 = vector.shape_cast %16 : vector<1x32x128xbf16> to vector<32x128xbf16>
    %c0_23 = arith.constant 0 : index
    %c0_24 = arith.constant 0 : index
    %c0_25 = arith.constant 0 : index
    %18 = vector.load %arg11[%c0_23, %c0_24, %c0_25] : memref<1x1x128xf32, #tpu.memory_space<vmem>>, vector<1x1x128xf32>
    %19 = vector.shape_cast %18 : vector<1x1x128xf32> to vector<1x128xf32>
    %c0_26 = arith.constant 0 : index
    %c0_27 = arith.constant 0 : index
    %c0_28 = arith.constant 0 : index
    %20 = vector.load %arg12[%c0_26, %c0_27, %c0_28] : memref<1x128x32xbf16, #tpu.memory_space<vmem>>, vector<1x128x32xbf16>
    %21 = vector.shape_cast %20 : vector<1x128x32xbf16> to vector<128x32xbf16>
    %c0_29 = arith.constant 0 : index
    %c0_30 = arith.constant 0 : index
    %c0_31 = arith.constant 0 : index
    %22 = vector.load %arg13[%c0_29, %c0_30, %c0_31] : memref<1x1x32xf32, #tpu.memory_space<vmem>>, vector<1x1x32xf32>
    %23 = vector.shape_cast %22 : vector<1x1x32xf32> to vector<1x32xf32>
    %c0_32 = arith.constant 0 : index
    %c0_33 = arith.constant 0 : index
    %c0_34 = arith.constant 0 : index
    %24 = vector.load %arg14[%c0_32, %c0_33, %c0_34] : memref<1x1x32xf32, #tpu.memory_space<vmem>>, vector<1x1x32xf32>
    %25 = vector.shape_cast %24 : vector<1x1x32xf32> to vector<1x32xf32>
    %c0_35 = arith.constant 0 : index
    %c0_36 = arith.constant 0 : index
    %c0_37 = arith.constant 0 : index
    %26 = vector.load %arg15[%c0_35, %c0_36, %c0_37] : memref<1x1x32xf32, #tpu.memory_space<vmem>>, vector<1x1x32xf32>
    %27 = vector.shape_cast %26 : vector<1x1x32xf32> to vector<1x32xf32>
    %28 = arith.truncf %3 : vector<8x32xf32> to vector<8x32xbf16>
    %cst = arith.constant dense<0.000000e+00> : vector<8x96xf32>
    %29 = tpu.matmul %28, %5, %cst {dimension_numbers = #tpu.dot_dimension_numbers<[1], [0], [0], [1], [0, 0, 1, 1], [], []>} : vector<8x32xbf16>, vector<32x96xbf16>, vector<8x96xf32> -> vector<8x96xf32>
    %30 = vector.broadcast %7 : vector<1x96xf32> to vector<8x96xf32>
    %31 = arith.addf %29, %30 : vector<8x96xf32>
    %32 = vector.extract_strided_slice %31 {offsets = [0, 0], sizes = [8, 32], strides = [1, 1]} : vector<8x96xf32> to vector<8x32xf32>
    %33 = vector.extract_strided_slice %31 {offsets = [0, 32], sizes = [8, 32], strides = [1, 1]} : vector<8x96xf32> to vector<8x32xf32>
    %34 = vector.extract_strided_slice %31 {offsets = [0, 64], sizes = [8, 32], strides = [1, 1]} : vector<8x96xf32> to vector<8x32xf32>
    %35 = vector.extract_strided_slice %32 {offsets = [0, 0], sizes = [8, 8], strides = [1, 1]} : vector<8x32xf32> to vector<8x8xf32>
    %cst_38 = arith.constant 0.353553385 : f32
    %36 = vector.broadcast %cst_38 : f32 to vector<8x8xf32>
    %37 = arith.mulf %35, %36 : vector<8x8xf32>
    %38 = arith.truncf %37 : vector<8x8xf32> to vector<8x8xbf16>
    %39 = vector.extract_strided_slice %33 {offsets = [0, 0], sizes = [8, 8], strides = [1, 1]} : vector<8x32xf32> to vector<8x8xf32>
    %40 = arith.truncf %39 : vector<8x8xf32> to vector<8x8xbf16>
    %41 = vector.extract_strided_slice %34 {offsets = [0, 0], sizes = [8, 8], strides = [1, 1]} : vector<8x32xf32> to vector<8x8xf32>
    %42 = arith.truncf %41 : vector<8x8xf32> to vector<8x8xbf16>
    %cst_39 = arith.constant dense<0.000000e+00> : vector<8x8xf32>
    %43 = tpu.matmul %38, %40, %cst_39 {dimension_numbers = #tpu.dot_dimension_numbers<[1], [1], [0], [0], [0, 0, 1, 0], [], []>} : vector<8x8xbf16>, vector<8x8xbf16>, vector<8x8xf32> -> vector<8x8xf32>
    %cst_40 = arith.constant dense<0xFF800000> : vector<8xf32>
    %44 = vector.multi_reduction <maximumf>, %43, %cst_40 [1] : vector<8x8xf32> to vector<8xf32>
    %45 = vector.shape_cast %44 : vector<8xf32> to vector<8x1xf32>
    %46 = vector.broadcast %45 : vector<8x1xf32> to vector<8x8xf32>
    %47 = arith.subf %43, %46 : vector<8x8xf32>
    %48 = math.exp %47 : vector<8x8xf32>
    %cst_41 = arith.constant dense<0.000000e+00> : vector<8xf32>
    %49 = vector.multi_reduction <add>, %48, %cst_41 [1] : vector<8x8xf32> to vector<8xf32>
    %50 = vector.shape_cast %49 : vector<8xf32> to vector<8x1xf32>
    %51 = tpu.reciprocal %50 {approx = true} : vector<8x1xf32> -> vector<8x1xf32>
    %52 = vector.broadcast %51 : vector<8x1xf32> to vector<8x8xf32>
    %53 = arith.mulf %48, %52 : vector<8x8xf32>
    %54 = arith.truncf %53 : vector<8x8xf32> to vector<8x8xbf16>
    %cst_42 = arith.constant dense<0.000000e+00> : vector<8x8xf32>
    %55 = tpu.matmul %54, %42, %cst_42 {dimension_numbers = #tpu.dot_dimension_numbers<[1], [0], [0], [1], [0, 0, 1, 1], [], []>} : vector<8x8xbf16>, vector<8x8xbf16>, vector<8x8xf32> -> vector<8x8xf32>
    %56 = vector.extract_strided_slice %32 {offsets = [0, 8], sizes = [8, 8], strides = [1, 1]} : vector<8x32xf32> to vector<8x8xf32>
    %cst_43 = arith.constant 0.353553385 : f32
    %57 = vector.broadcast %cst_43 : f32 to vector<8x8xf32>
    %58 = arith.mulf %56, %57 : vector<8x8xf32>
    %59 = arith.truncf %58 : vector<8x8xf32> to vector<8x8xbf16>
    %60 = vector.extract_strided_slice %33 {offsets = [0, 8], sizes = [8, 8], strides = [1, 1]} : vector<8x32xf32> to vector<8x8xf32>
    %61 = arith.truncf %60 : vector<8x8xf32> to vector<8x8xbf16>
    %62 = vector.extract_strided_slice %34 {offsets = [0, 8], sizes = [8, 8], strides = [1, 1]} : vector<8x32xf32> to vector<8x8xf32>
    %63 = arith.truncf %62 : vector<8x8xf32> to vector<8x8xbf16>
    %cst_44 = arith.constant dense<0.000000e+00> : vector<8x8xf32>
    %64 = tpu.matmul %59, %61, %cst_44 {dimension_numbers = #tpu.dot_dimension_numbers<[1], [1], [0], [0], [0, 0, 1, 0], [], []>} : vector<8x8xbf16>, vector<8x8xbf16>, vector<8x8xf32> -> vector<8x8xf32>
    %cst_45 = arith.constant dense<0xFF800000> : vector<8xf32>
    %65 = vector.multi_reduction <maximumf>, %64, %cst_45 [1] : vector<8x8xf32> to vector<8xf32>
    %66 = vector.shape_cast %65 : vector<8xf32> to vector<8x1xf32>
    %67 = vector.broadcast %66 : vector<8x1xf32> to vector<8x8xf32>
    %68 = arith.subf %64, %67 : vector<8x8xf32>
    %69 = math.exp %68 : vector<8x8xf32>
    %cst_46 = arith.constant dense<0.000000e+00> : vector<8xf32>
    %70 = vector.multi_reduction <add>, %69, %cst_46 [1] : vector<8x8xf32> to vector<8xf32>
    %71 = vector.shape_cast %70 : vector<8xf32> to vector<8x1xf32>
    %72 = tpu.reciprocal %71 {approx = true} : vector<8x1xf32> -> vector<8x1xf32>
    %73 = vector.broadcast %72 : vector<8x1xf32> to vector<8x8xf32>
    %74 = arith.mulf %69, %73 : vector<8x8xf32>
    %75 = arith.truncf %74 : vector<8x8xf32> to vector<8x8xbf16>
    %cst_47 = arith.constant dense<0.000000e+00> : vector<8x8xf32>
    %76 = tpu.matmul %75, %63, %cst_47 {dimension_numbers = #tpu.dot_dimension_numbers<[1], [0], [0], [1], [0, 0, 1, 1], [], []>} : vector<8x8xbf16>, vector<8x8xbf16>, vector<8x8xf32> -> vector<8x8xf32>
    %77 = vector.extract_strided_slice %32 {offsets = [0, 16], sizes = [8, 8], strides = [1, 1]} : vector<8x32xf32> to vector<8x8xf32>
    %cst_48 = arith.constant 0.353553385 : f32
    %78 = vector.broadcast %cst_48 : f32 to vector<8x8xf32>
    %79 = arith.mulf %77, %78 : vector<8x8xf32>
    %80 = arith.truncf %79 : vector<8x8xf32> to vector<8x8xbf16>
    %81 = vector.extract_strided_slice %33 {offsets = [0, 16], sizes = [8, 8], strides = [1, 1]} : vector<8x32xf32> to vector<8x8xf32>
    %82 = arith.truncf %81 : vector<8x8xf32> to vector<8x8xbf16>
    %83 = vector.extract_strided_slice %34 {offsets = [0, 16], sizes = [8, 8], strides = [1, 1]} : vector<8x32xf32> to vector<8x8xf32>
    %84 = arith.truncf %83 : vector<8x8xf32> to vector<8x8xbf16>
    %cst_49 = arith.constant dense<0.000000e+00> : vector<8x8xf32>
    %85 = tpu.matmul %80, %82, %cst_49 {dimension_numbers = #tpu.dot_dimension_numbers<[1], [1], [0], [0], [0, 0, 1, 0], [], []>} : vector<8x8xbf16>, vector<8x8xbf16>, vector<8x8xf32> -> vector<8x8xf32>
    %cst_50 = arith.constant dense<0xFF800000> : vector<8xf32>
    %86 = vector.multi_reduction <maximumf>, %85, %cst_50 [1] : vector<8x8xf32> to vector<8xf32>
    %87 = vector.shape_cast %86 : vector<8xf32> to vector<8x1xf32>
    %88 = vector.broadcast %87 : vector<8x1xf32> to vector<8x8xf32>
    %89 = arith.subf %85, %88 : vector<8x8xf32>
    %90 = math.exp %89 : vector<8x8xf32>
    %cst_51 = arith.constant dense<0.000000e+00> : vector<8xf32>
    %91 = vector.multi_reduction <add>, %90, %cst_51 [1] : vector<8x8xf32> to vector<8xf32>
    %92 = vector.shape_cast %91 : vector<8xf32> to vector<8x1xf32>
    %93 = tpu.reciprocal %92 {approx = true} : vector<8x1xf32> -> vector<8x1xf32>
    %94 = vector.broadcast %93 : vector<8x1xf32> to vector<8x8xf32>
    %95 = arith.mulf %90, %94 : vector<8x8xf32>
    %96 = arith.truncf %95 : vector<8x8xf32> to vector<8x8xbf16>
    %cst_52 = arith.constant dense<0.000000e+00> : vector<8x8xf32>
    %97 = tpu.matmul %96, %84, %cst_52 {dimension_numbers = #tpu.dot_dimension_numbers<[1], [0], [0], [1], [0, 0, 1, 1], [], []>} : vector<8x8xbf16>, vector<8x8xbf16>, vector<8x8xf32> -> vector<8x8xf32>
    %98 = vector.extract_strided_slice %32 {offsets = [0, 24], sizes = [8, 8], strides = [1, 1]} : vector<8x32xf32> to vector<8x8xf32>
    %cst_53 = arith.constant 0.353553385 : f32
    %99 = vector.broadcast %cst_53 : f32 to vector<8x8xf32>
    %100 = arith.mulf %98, %99 : vector<8x8xf32>
    %101 = arith.truncf %100 : vector<8x8xf32> to vector<8x8xbf16>
    %102 = vector.extract_strided_slice %33 {offsets = [0, 24], sizes = [8, 8], strides = [1, 1]} : vector<8x32xf32> to vector<8x8xf32>
    %103 = arith.truncf %102 : vector<8x8xf32> to vector<8x8xbf16>
    %104 = vector.extract_strided_slice %34 {offsets = [0, 24], sizes = [8, 8], strides = [1, 1]} : vector<8x32xf32> to vector<8x8xf32>
    %105 = arith.truncf %104 : vector<8x8xf32> to vector<8x8xbf16>
    %cst_54 = arith.constant dense<0.000000e+00> : vector<8x8xf32>
    %106 = tpu.matmul %101, %103, %cst_54 {dimension_numbers = #tpu.dot_dimension_numbers<[1], [1], [0], [0], [0, 0, 1, 0], [], []>} : vector<8x8xbf16>, vector<8x8xbf16>, vector<8x8xf32> -> vector<8x8xf32>
    %cst_55 = arith.constant dense<0xFF800000> : vector<8xf32>
    %107 = vector.multi_reduction <maximumf>, %106, %cst_55 [1] : vector<8x8xf32> to vector<8xf32>
    %108 = vector.shape_cast %107 : vector<8xf32> to vector<8x1xf32>
    %109 = vector.broadcast %108 : vector<8x1xf32> to vector<8x8xf32>
    %110 = arith.subf %106, %109 : vector<8x8xf32>
    %111 = math.exp %110 : vector<8x8xf32>
    %cst_56 = arith.constant dense<0.000000e+00> : vector<8xf32>
    %112 = vector.multi_reduction <add>, %111, %cst_56 [1] : vector<8x8xf32> to vector<8xf32>
    %113 = vector.shape_cast %112 : vector<8xf32> to vector<8x1xf32>
    %114 = tpu.reciprocal %113 {approx = true} : vector<8x1xf32> -> vector<8x1xf32>
    %115 = vector.broadcast %114 : vector<8x1xf32> to vector<8x8xf32>
    %116 = arith.mulf %111, %115 : vector<8x8xf32>
    %117 = arith.truncf %116 : vector<8x8xf32> to vector<8x8xbf16>
    %cst_57 = arith.constant dense<0.000000e+00> : vector<8x8xf32>
    %118 = tpu.matmul %117, %105, %cst_57 {dimension_numbers = #tpu.dot_dimension_numbers<[1], [0], [0], [1], [0, 0, 1, 1], [], []>} : vector<8x8xbf16>, vector<8x8xbf16>, vector<8x8xf32> -> vector<8x8xf32>
    %119 = tpu.concatenate %55, %76, %97, %118 in 1 : vector<8x8xf32>, vector<8x8xf32>, vector<8x8xf32>, vector<8x8xf32> -> vector<8x32xf32>
    %120 = arith.truncf %119 : vector<8x32xf32> to vector<8x32xbf16>
    %cst_58 = arith.constant dense<0.000000e+00> : vector<8x32xf32>
    %121 = tpu.matmul %120, %9, %cst_58 {dimension_numbers = #tpu.dot_dimension_numbers<[1], [0], [0], [1], [0, 0, 1, 1], [], []>} : vector<8x32xbf16>, vector<32x32xbf16>, vector<8x32xf32> -> vector<8x32xf32>
    %122 = vector.broadcast %11 : vector<1x32xf32> to vector<8x32xf32>
    %123 = arith.addf %121, %122 : vector<8x32xf32>
    %124 = arith.addf %3, %123 : vector<8x32xf32>
    %cst_59 = arith.constant dense<0.000000e+00> : vector<8xf32>
    %125 = vector.multi_reduction <add>, %124, %cst_59 [1] : vector<8x32xf32> to vector<8xf32>
    %126 = vector.shape_cast %125 : vector<8xf32> to vector<8x1xf32>
    %cst_60 = arith.constant 3.200000e+01 : f32
    %127 = vector.broadcast %cst_60 : f32 to vector<8x1xf32>
    %128 = arith.divf %126, %127 : vector<8x1xf32>
    %129 = vector.broadcast %128 : vector<8x1xf32> to vector<8x32xf32>
    %130 = arith.subf %124, %129 : vector<8x32xf32>
    %131 = arith.mulf %130, %130 : vector<8x32xf32>
    %cst_61 = arith.constant dense<0.000000e+00> : vector<8xf32>
    %132 = vector.multi_reduction <add>, %131, %cst_61 [1] : vector<8x32xf32> to vector<8xf32>
    %133 = vector.shape_cast %132 : vector<8xf32> to vector<8x1xf32>
    %cst_62 = arith.constant 3.200000e+01 : f32
    %134 = vector.broadcast %cst_62 : f32 to vector<8x1xf32>
    %135 = arith.divf %133, %134 : vector<8x1xf32>
    %136 = vector.broadcast %128 : vector<8x1xf32> to vector<8x32xf32>
    %137 = arith.subf %124, %136 : vector<8x32xf32>
    %cst_63 = arith.constant 9.99999974E-6 : f32
    %138 = vector.broadcast %cst_63 : f32 to vector<8x1xf32>
    %139 = arith.addf %135, %138 : vector<8x1xf32>
    %140 = math.rsqrt %139 : vector<8x1xf32>
    %141 = vector.broadcast %140 : vector<8x1xf32> to vector<8x32xf32>
    %142 = arith.mulf %137, %141 : vector<8x32xf32>
    %143 = vector.broadcast %13 : vector<1x32xf32> to vector<8x32xf32>
    %144 = arith.mulf %142, %143 : vector<8x32xf32>
    %145 = vector.broadcast %15 : vector<1x32xf32> to vector<8x32xf32>
    %146 = arith.addf %144, %145 : vector<8x32xf32>
    %147 = arith.truncf %146 : vector<8x32xf32> to vector<8x32xbf16>
    %cst_64 = arith.constant dense<0.000000e+00> : vector<8x128xf32>
    %148 = tpu.matmul %147, %17, %cst_64 {dimension_numbers = #tpu.dot_dimension_numbers<[1], [0], [0], [1], [0, 0, 1, 1], [], []>} : vector<8x32xbf16>, vector<32x128xbf16>, vector<8x128xf32> -> vector<8x128xf32>
    %149 = vector.broadcast %19 : vector<1x128xf32> to vector<8x128xf32>
    %150 = arith.addf %148, %149 : vector<8x128xf32>
    %cst_65 = arith.constant 0.000000e+00 : f32
    %151 = vector.broadcast %cst_65 : f32 to vector<8x128xf32>
    %152 = arith.maximumf %150, %151 : vector<8x128xf32>
    %153 = arith.truncf %152 : vector<8x128xf32> to vector<8x128xbf16>
    %cst_66 = arith.constant dense<0.000000e+00> : vector<8x32xf32>
    %154 = tpu.matmul %153, %21, %cst_66 {dimension_numbers = #tpu.dot_dimension_numbers<[1], [0], [0], [1], [0, 0, 1, 1], [], []>} : vector<8x128xbf16>, vector<128x32xbf16>, vector<8x32xf32> -> vector<8x32xf32>
    %155 = vector.broadcast %23 : vector<1x32xf32> to vector<8x32xf32>
    %156 = arith.addf %154, %155 : vector<8x32xf32>
    %157 = arith.addf %146, %156 : vector<8x32xf32>
    %cst_67 = arith.constant dense<0.000000e+00> : vector<8xf32>
    %158 = vector.multi_reduction <add>, %157, %cst_67 [1] : vector<8x32xf32> to vector<8xf32>
    %159 = vector.shape_cast %158 : vector<8xf32> to vector<8x1xf32>
    %cst_68 = arith.constant 3.200000e+01 : f32
    %160 = vector.broadcast %cst_68 : f32 to vector<8x1xf32>
    %161 = arith.divf %159, %160 : vector<8x1xf32>
    %162 = vector.broadcast %161 : vector<8x1xf32> to vector<8x32xf32>
    %163 = arith.subf %157, %162 : vector<8x32xf32>
    %164 = arith.mulf %163, %163 : vector<8x32xf32>
    %cst_69 = arith.constant dense<0.000000e+00> : vector<8xf32>
    %165 = vector.multi_reduction <add>, %164, %cst_69 [1] : vector<8x32xf32> to vector<8xf32>
    %166 = vector.shape_cast %165 : vector<8xf32> to vector<8x1xf32>
    %cst_70 = arith.constant 3.200000e+01 : f32
    %167 = vector.broadcast %cst_70 : f32 to vector<8x1xf32>
    %168 = arith.divf %166, %167 : vector<8x1xf32>
    %169 = vector.broadcast %161 : vector<8x1xf32> to vector<8x32xf32>
    %170 = arith.subf %157, %169 : vector<8x32xf32>
    %cst_71 = arith.constant 9.99999974E-6 : f32
    %171 = vector.broadcast %cst_71 : f32 to vector<8x1xf32>
    %172 = arith.addf %168, %171 : vector<8x1xf32>
    %173 = math.rsqrt %172 : vector<8x1xf32>
    %174 = vector.broadcast %173 : vector<8x1xf32> to vector<8x32xf32>
    %175 = arith.mulf %170, %174 : vector<8x32xf32>
    %176 = vector.broadcast %25 : vector<1x32xf32> to vector<8x32xf32>
    %177 = arith.mulf %175, %176 : vector<8x32xf32>
    %178 = vector.broadcast %27 : vector<1x32xf32> to vector<8x32xf32>
    %179 = arith.addf %177, %178 : vector<8x32xf32>
    %c0_72 = arith.constant 0 : index
    %c0_73 = arith.constant 0 : index
    %180 = vector.load %arg16[%c0_72, %c0_73] : memref<8x32xf32, #tpu.memory_space<vmem>>, vector<8x32xf32>
    tpu.vector_store %arg16[%c0_72, %c0_73], %179 {strides = array<i32>} : memref<8x32xf32, #tpu.memory_space<vmem>>, vector<8x32xf32>,
    return
  }
  func.func @transform_0(%arg0: i32) -> (i32, i32) {
    %c0_i32 = arith.constant 0 : i32
    %c0_i32_0 = arith.constant 0 : i32
    %c0_i32_1 = arith.constant 0 : i32
    return %c0_i32, %c0_i32_0 : i32, i32
  }
  func.func @transform_1(%arg0: i32) -> (i32, i32) {
    %c0_i32 = arith.constant 0 : i32
    %c0_i32_0 = arith.constant 0 : i32
    %c0_i32_1 = arith.constant 0 : i32
    return %c0_i32, %c0_i32_0 : i32, i32
  }
  func.func @transform_2(%arg0: i32) -> (i32, i32) {
    %c0_i32 = arith.constant 0 : i32
    %c0_i32_0 = arith.constant 0 : i32
    %c0_i32_1 = arith.constant 0 : i32
    return %c0_i32, %c0_i32_0 : i32, i32
  }
  func.func @transform_3(%arg0: i32) -> (i32, i32, i32) {
    %c0_i32 = arith.constant 0 : i32
    %c0_i32_0 = arith.constant 0 : i32
    %c0_i32_1 = arith.constant 0 : i32
    return %arg0, %c0_i32, %c0_i32_0 : i32, i32, i32
  }
  func.func @transform_4(%arg0: i32) -> (i32, i32, i32) {
    %c0_i32 = arith.constant 0 : i32
    %c0_i32_0 = arith.constant 0 : i32
    %c0_i32_1 = arith.constant 0 : i32
    return %arg0, %c0_i32, %c0_i32_0 : i32, i32, i32
  }
  func.func @transform_5(%arg0: i32) -> (i32, i32, i32) {
    %c0_i32 = arith.constant 0 : i32
    %c0_i32_0 = arith.constant 0 : i32
    %c0_i32_1 = arith.constant 0 : i32
    return %arg0, %c0_i32, %c0_i32_0 : i32, i32, i32
  }
  func.func @transform_6(%arg0: i32) -> (i32, i32, i32) {
    %c0_i32 = arith.constant 0 : i32
    %c0_i32_0 = arith.constant 0 : i32
    %c0_i32_1 = arith.constant 0 : i32
    return %arg0, %c0_i32, %c0_i32_0 : i32, i32, i32
  }
  func.func @transform_7(%arg0: i32) -> (i32, i32, i32) {
    %c0_i32 = arith.constant 0 : i32
    %c0_i32_0 = arith.constant 0 : i32
    %c0_i32_1 = arith.constant 0 : i32
    return %arg0, %c0_i32, %c0_i32_0 : i32, i32, i32
  }
  func.func @transform_8(%arg0: i32) -> (i32, i32, i32) {
    %c0_i32 = arith.constant 0 : i32
    %c0_i32_0 = arith.constant 0 : i32
    %c0_i32_1 = arith.constant 0 : i32
    return %arg0, %c0_i32, %c0_i32_0 : i32, i32, i32
  }
  func.func @transform_9(%arg0: i32) -> (i32, i32, i32) {
    %c0_i32 = arith.constant 0 : i32
    %c0_i32_0 = arith.constant 0 : i32
    %c0_i32_1 = arith.constant 0 : i32
    return %arg0, %c0_i32, %c0_i32_0 : i32, i32, i32
  }
  func.func @transform_10(%arg0: i32) -> (i32, i32, i32) {
    %c0_i32 = arith.constant 0 : i32
    %c0_i32_0 = arith.constant 0 : i32
    %c0_i32_1 = arith.constant 0 : i32
    return %arg0, %c0_i32, %c0_i32_0 : i32, i32, i32
  }
  func.func @transform_11(%arg0: i32) -> (i32, i32, i32) {
    %c0_i32 = arith.constant 0 : i32
    %c0_i32_0 = arith.constant 0 : i32
    %c0_i32_1 = arith.constant 0 : i32
    return %arg0, %c0_i32, %c0_i32_0 : i32, i32, i32
  }
  func.func @transform_12(%arg0: i32) -> (i32, i32, i32) {
    %c0_i32 = arith.constant 0 : i32
    %c0_i32_0 = arith.constant 0 : i32
    %c0_i32_1 = arith.constant 0 : i32
    return %arg0, %c0_i32, %c0_i32_0 : i32, i32, i32
  }
  func.func @transform_13(%arg0: i32) -> (i32, i32, i32) {
    %c0_i32 = arith.constant 0 : i32
    %c0_i32_0 = arith.constant 0 : i32
    %c0_i32_1 = arith.constant 0 : i32
    return %arg0, %c0_i32, %c0_i32_0 : i32, i32, i32
  }
  func.func @transform_14(%arg0: i32) -> (i32, i32, i32) {
    %c0_i32 = arith.constant 0 : i32
    %c0_i32_0 = arith.constant 0 : i32
    %c0_i32_1 = arith.constant 0 : i32
    return %arg0, %c0_i32, %c0_i32_0 : i32, i32, i32
  }
  func.func @transform_15(%arg0: i32) -> (i32, i32) {
    %c0_i32 = arith.constant 0 : i32
    %c0_i32_0 = arith.constant 0 : i32
    %c0_i32_1 = arith.constant 0 : i32
    return %c0_i32, %c0_i32_0 : i32, i32
  }
}

</mosaic_0001>

<llo_original>
// kernel: bert_forward.1
$region0: #{bert_forward.1}
  #allocation0 [shape = 'u32[]', space=smem, size = 0x4, offset = 0x4, fixed_abs, tag = 'smem constant byte address 0x4 - core index']
  #allocation1 [shape = 'u32[72,128]{1,0:T(1,128)}', space=vmem, size = 0x9000, scoped, tag = 'internal scratch']
  %s0 = inlined_call_operand.vmem [shape: f32[8,32], index: 0, kind: input, shape index: {}]
  %s1 = inlined_call_operand.vmem [shape: f32[8,32], index: 1, kind: input, shape index: {}]
  %s2 = inlined_call_operand.vmem [shape: f32[8,32], index: 2, kind: input, shape index: {}]
  %s3 = inlined_call_operand.vmem [shape: bf16[2,32,96], index: 3, kind: input, shape index: {}]
  %s4 = inlined_call_operand.vmem [shape: f32[2,1,96], index: 4, kind: input, shape index: {}]
  %s5 = inlined_call_operand.vmem [shape: bf16[2,32,32], index: 5, kind: input, shape index: {}]
  %s6 = inlined_call_operand.vmem [shape: f32[2,1,32], index: 6, kind: input, shape index: {}]
  %s7 = inlined_call_operand.vmem [shape: f32[2,1,32], index: 7, kind: input, shape index: {}]
  %s8 = inlined_call_operand.vmem [shape: f32[2,1,32], index: 8, kind: input, shape index: {}]
  %s9 = inlined_call_operand.vmem [shape: bf16[2,32,128], index: 9, kind: input, shape index: {}]
  %s10 = inlined_call_operand.vmem [shape: f32[2,1,128], index: 10, kind: input, shape index: {}]
  %s11 = inlined_call_operand.vmem [shape: bf16[2,128,32], index: 11, kind: input, shape index: {}]
  %s12 = inlined_call_operand.vmem [shape: f32[2,1,32], index: 12, kind: input, shape index: {}]
  %s13 = inlined_call_operand.vmem [shape: f32[2,1,32], index: 13, kind: input, shape index: {}]
  %s14 = inlined_call_operand.vmem [shape: f32[2,1,32], index: 14, kind: input, shape index: {}]
  %s15 = inlined_call_operand.hbm [shape: f32[8,32], index: 15, kind: output, shape index: {}]
  %s16 = sld [smem:[#allocation0]]
  $region97: #{bert_forward.1} parent=0
    _
  %s18 = ssub.s32 1, %s16
  %s19 = scalar_select 0, %s18, %s16
  $region1: #{bert_forward.1} parent=0
    #allocation2 [shape = 'u8[4096]{0}', space=vmem, size = 0x1000, scoped, tag = 'output window, operand 0, single buffered']
    #allocation3 [shape = 's32[2]{0}', space=sflag, size = 0x8, scoped, tag = 'scoped memory for bert_forward.1']
    %20 = vsyncpa [#allocation3], 0
    loop: start=0, step=1, limit=4
    $region2: #{bert_forward.1} parent=1 // loop_pre_header
      _
    $region3: #{bert_forward.1} parent=1 // loop_header
      %s22 = sphi 0, %s26
      %p23 = scmp.ge.s32.totalorder %s22, 4
      %s30 = sphi 0, %s30
      %s32 = sphi 0, %s30
      %s33 = sphi 0, %s32
      %s47 = sphi 0, %s33
      %s51 = sphi 0, %s51
      %s53 = sphi 0, %s51
      %s54 = sphi 0, %s53
      %s68 = sphi 0, %s54
      %s72 = sphi 0, %s72
      %s74 = sphi 0, %s72
      %s75 = sphi 0, %s74
      %s89 = sphi 0, %s75
      %s95 = sphi 0, %s97
      %s98 = sphi 0, %s95
      %s99 = sphi 0, %s98
      %s115 = sphi 0, %s99
      %s121 = sphi 0, %s123
      %s124 = sphi 0, %s121
      %s125 = sphi 0, %s124
      %s141 = sphi 0, %s125
      %s147 = sphi 0, %s149
      %s150 = sphi 0, %s147
      %s151 = sphi 0, %s150
      %s167 = sphi 0, %s151
      %s173 = sphi 0, %s175
      %s176 = sphi 0, %s173
      %s177 = sphi 0, %s176
      %s193 = sphi 0, %s177
      %s199 = sphi 0, %s201
      %s202 = sphi 0, %s199
      %s203 = sphi 0, %s202
      %s219 = sphi 0, %s203
      %s225 = sphi 0, %s227
      %s228 = sphi 0, %s225
      %s229 = sphi 0, %s228
      %s245 = sphi 0, %s229
      %s251 = sphi 0, %s253
      %s254 = sphi 0, %s251
      %s255 = sphi 0, %s254
      %s271 = sphi 0, %s255
      %s277 = sphi 0, %s279
      %s280 = sphi 0, %s277
      %s281 = sphi 0, %s280
      %s297 = sphi 0, %s281
      %s303 = sphi 0, %s305
      %s306 = sphi 0, %s303
      %s307 = sphi 0, %s306
      %s323 = sphi 0, %s307
      %s329 = sphi 0, %s331
      %s332 = sphi 0, %s329
      %s333 = sphi 0, %s332
      %s349 = sphi 0, %s333
      %s355 = sphi 0, %s357
      %s358 = sphi 0, %s355
      %s359 = sphi 0, %s358
      %s375 = sphi 0, %s359
      %s381 = sphi 0, %s383
      %s384 = sphi 0, %s381
      %s385 = sphi 0, %s384
      %s401 = sphi 0, %s385
      %s405 = sphi 0, %s405
      %s407 = sphi 0, %s405
      %s408 = sphi 0, %s407
      %s422 = sphi 0, %s408
    $region4: #{bert_forward.1} parent=1 // loop_header_branch
      %25 = sbr.rel (%p23) target = $region8
    $region5: #{bert_forward.1} parent=1 // loop_body
      %s27 = ssub.s32 %s22, 1
      %s28 = ssub.s32 %s22, 2
      %s29 = sadd.s32 %s22, 1
      %s31 = sadd.s32 %s30, 1
      %p34 = scmp.eq.s32.totalorder %s22, 1
      %p35 = scmp.ne.s32.totalorder %s30, %s32
      %p36 = scmp.eq.s32.totalorder %s22, 0
      %p37 = por %p35, %p36
      %p38 = scmp.ne.s32.totalorder %s30, %s32
      %p39 = scmp.eq.s32.totalorder %s27, 1
      %p40 = por %p38, %p39
      %p41 = scmp.ne.s32.totalorder %s32, %s33
      %p42 = scmp.eq.s32.totalorder %s27, 0
      %p43 = por %p41, %p42
      %p44 = scmp.ne.s32.totalorder %s32, %s33
      %p45 = scmp.eq.s32.totalorder %s28, 1
      %p46 = por %p44, %p45
      %p48 = scmp.ne.s32.totalorder %s33, %s47
      %p49 = scmp.eq.s32.totalorder %s28, 0
      %p50 = por %p48, %p49
      %s52 = sadd.s32 %s51, 1
      %p55 = scmp.eq.s32.totalorder %s22, 1
      %p56 = scmp.ne.s32.totalorder %s51, %s53
      %p57 = scmp.eq.s32.totalorder %s22, 0
      %p58 = por %p56, %p57
      %p59 = scmp.ne.s32.totalorder %s51, %s53
      %p60 = scmp.eq.s32.totalorder %s27, 1
      %p61 = por %p59, %p60
      %p62 = scmp.ne.s32.totalorder %s53, %s54
      %p63 = scmp.eq.s32.totalorder %s27, 0
      %p64 = por %p62, %p63
      %p65 = scmp.ne.s32.totalorder %s53, %s54
      %p66 = scmp.eq.s32.totalorder %s28, 1
      %p67 = por %p65, %p66
      %p69 = scmp.ne.s32.totalorder %s54, %s68
      %p70 = scmp.eq.s32.totalorder %s28, 0
      %p71 = por %p69, %p70
      %s73 = sadd.s32 %s72, 1
      %p76 = scmp.eq.s32.totalorder %s22, 1
      %p77 = scmp.ne.s32.totalorder %s72, %s74
      %p78 = scmp.eq.s32.totalorder %s22, 0
      %p79 = por %p77, %p78
      %p80 = scmp.ne.s32.totalorder %s72, %s74
      %p81 = scmp.eq.s32.totalorder %s27, 1
      %p82 = por %p80, %p81
      %p83 = scmp.ne.s32.totalorder %s74, %s75
      %p84 = scmp.eq.s32.totalorder %s27, 0
      %p85 = por %p83, %p84
      %p86 = scmp.ne.s32.totalorder %s74, %s75
      %p87 = scmp.eq.s32.totalorder %s28, 1
      %p88 = por %p86, %p87
      %p90 = scmp.ne.s32.totalorder %s75, %s89
      %p91 = scmp.eq.s32.totalorder %s28, 0
      %p92 = por %p90, %p91
      %s93 = ssub.s32 %s22, %s29
      %p94 = scmp.eq.s32.totalorder %s93, 0
      %s96 = sadd.s32 %s95, 1
      %s97 = scalar_select %p94, %s95, %s96
      %p100 = pneg %p94
      %p101 = scmp.eq.s32.totalorder %s22, 1
      %p102 = por %p100, %p101
      %p103 = scmp.ne.s32.totalorder %s95, %s98
      %p104 = scmp.eq.s32.totalorder %s22, 0
      %p105 = por %p103, %p104
      %p106 = scmp.ne.s32.totalorder %s95, %s98
      %p107 = scmp.eq.s32.totalorder %s27, 1
      %p108 = por %p106, %p107
      %p109 = scmp.ne.s32.totalorder %s98, %s99
      %p110 = scmp.eq.s32.totalorder %s27, 0
      %p111 = por %p109, %p110
      %p112 = scmp.ne.s32.totalorder %s98, %s99
      %p113 = scmp.eq.s32.totalorder %s28, 1
      %p114 = por %p112, %p113
      %p116 = scmp.ne.s32.totalorder %s99, %s115
      %p117 = scmp.eq.s32.totalorder %s28, 0
      %p118 = por %p116, %p117
      %s119 = ssub.s32 %s22, %s29
      %p120 = scmp.eq.s32.totalorder %s119, 0
      %s122 = sadd.s32 %s121, 1
      %s123 = scalar_select %p120, %s121, %s122
      %p126 = pneg %p120
      %p127 = scmp.eq.s32.totalorder %s22, 1
      %p128 = por %p126, %p127
      %p129 = scmp.ne.s32.totalorder %s121, %s124
      %p130 = scmp.eq.s32.totalorder %s22, 0
      %p131 = por %p129, %p130
      %p132 = scmp.ne.s32.totalorder %s121, %s124
      %p133 = scmp.eq.s32.totalorder %s27, 1
      %p134 = por %p132, %p133
      %p135 = scmp.ne.s32.totalorder %s124, %s125
      %p136 = scmp.eq.s32.totalorder %s27, 0
      %p137 = por %p135, %p136
      %p138 = scmp.ne.s32.totalorder %s124, %s125
      %p139 = scmp.eq.s32.totalorder %s28, 1
      %p140 = por %p138, %p139
      %p142 = scmp.ne.s32.totalorder %s125, %s141
      %p143 = scmp.eq.s32.totalorder %s28, 0
      %p144 = por %p142, %p143
      %s145 = ssub.s32 %s22, %s29
      %p146 = scmp.eq.s32.totalorder %s145, 0
      %s148 = sadd.s32 %s147, 1
      %s149 = scalar_select %p146, %s147, %s148
      %p152 = pneg %p146
      %p153 = scmp.eq.s32.totalorder %s22, 1
      %p154 = por %p152, %p153
      %p155 = scmp.ne.s32.totalorder %s147, %s150
      %p156 = scmp.eq.s32.totalorder %s22, 0
      %p157 = por %p155, %p156
      %p158 = scmp.ne.s32.totalorder %s147, %s150
      %p159 = scmp.eq.s32.totalorder %s27, 1
      %p160 = por %p158, %p159
      %p161 = scmp.ne.s32.totalorder %s150, %s151
      %p162 = scmp.eq.s32.totalorder %s27, 0
      %p163 = por %p161, %p162
      %p164 = scmp.ne.s32.totalorder %s150, %s151
      %p165 = scmp.eq.s32.totalorder %s28, 1
      %p166 = por %p164, %p165
      %p168 = scmp.ne.s32.totalorder %s151, %s167
      %p169 = scmp.eq.s32.totalorder %s28, 0
      %p170 = por %p168, %p169
      %s171 = ssub.s32 %s22, %s29
      %p172 = scmp.eq.s32.totalorder %s171, 0
      %s174 = sadd.s32 %s173, 1
      %s175 = scalar_select %p172, %s173, %s174
      %p178 = pneg %p172
      %p179 = scmp.eq.s32.totalorder %s22, 1
      %p180 = por %p178, %p179
      %p181 = scmp.ne.s32.totalorder %s173, %s176
      %p182 = scmp.eq.s32.totalorder %s22, 0
      %p183 = por %p181, %p182
      %p184 = scmp.ne.s32.totalorder %s173, %s176
      %p185 = scmp.eq.s32.totalorder %s27, 1
      %p186 = por %p184, %p185
      %p187 = scmp.ne.s32.totalorder %s176, %s177
      %p188 = scmp.eq.s32.totalorder %s27, 0
      %p189 = por %p187, %p188
      %p190 = scmp.ne.s32.totalorder %s176, %s177
      %p191 = scmp.eq.s32.totalorder %s28, 1
      %p192 = por %p190, %p191
      %p194 = scmp.ne.s32.totalorder %s177, %s193
      %p195 = scmp.eq.s32.totalorder %s28, 0
      %p196 = por %p194, %p195
      %s197 = ssub.s32 %s22, %s29
      %p198 = scmp.eq.s32.totalorder %s197, 0
      %s200 = sadd.s32 %s199, 1
      %s201 = scalar_select %p198, %s199, %s200
      %p204 = pneg %p198
      %p205 = scmp.eq.s32.totalorder %s22, 1
      %p206 = por %p204, %p205
      %p207 = scmp.ne.s32.totalorder %s199, %s202
      %p208 = scmp.eq.s32.totalorder %s22, 0
      %p209 = por %p207, %p208
      %p210 = scmp.ne.s32.totalorder %s199, %s202
      %p211 = scmp.eq.s32.totalorder %s27, 1
      %p212 = por %p210, %p211
      %p213 = scmp.ne.s32.totalorder %s202, %s203
      %p214 = scmp.eq.s32.totalorder %s27, 0
      %p215 = por %p213, %p214
      %p216 = scmp.ne.s32.totalorder %s202, %s203
      %p217 = scmp.eq.s32.totalorder %s28, 1
      %p218 = por %p216, %p217
      %p220 = scmp.ne.s32.totalorder %s203, %s219
      %p221 = scmp.eq.s32.totalorder %s28, 0
      %p222 = por %p220, %p221
      %s223 = ssub.s32 %s22, %s29
      %p224 = scmp.eq.s32.totalorder %s223, 0
      %s226 = sadd.s32 %s225, 1
      %s227 = scalar_select %p224, %s225, %s226
      %p230 = pneg %p224
      %p231 = scmp.eq.s32.totalorder %s22, 1
      %p232 = por %p230, %p231
      %p233 = scmp.ne.s32.totalorder %s225, %s228
      %p234 = scmp.eq.s32.totalorder %s22, 0
      %p235 = por %p233, %p234
      %p236 = scmp.ne.s32.totalorder %s225, %s228
      %p237 = scmp.eq.s32.totalorder %s27, 1
      %p238 = por %p236, %p237
      %p239 = scmp.ne.s32.totalorder %s228, %s229
      %p240 = scmp.eq.s32.totalorder %s27, 0
      %p241 = por %p239, %p240
      %p242 = scmp.ne.s32.totalorder %s228, %s229
      %p243 = scmp.eq.s32.totalorder %s28, 1
      %p244 = por %p242, %p243
      %p246 = scmp.ne.s32.totalorder %s229, %s245
      %p247 = scmp.eq.s32.totalorder %s28, 0
      %p248 = por %p246, %p247
      %s249 = ssub.s32 %s22, %s29
      %p250 = scmp.eq.s32.totalorder %s249, 0
      %s252 = sadd.s32 %s251, 1
      %s253 = scalar_select %p250, %s251, %s252
      %p256 = pneg %p250
      %p257 = scmp.eq.s32.totalorder %s22, 1
      %p258 = por %p256, %p257
      %p259 = scmp.ne.s32.totalorder %s251, %s254
      %p260 = scmp.eq.s32.totalorder %s22, 0
      %p261 = por %p259, %p260
      %p262 = scmp.ne.s32.totalorder %s251, %s254
      %p263 = scmp.eq.s32.totalorder %s27, 1
      %p264 = por %p262, %p263
      %p265 = scmp.ne.s32.totalorder %s254, %s255
      %p266 = scmp.eq.s32.totalorder %s27, 0
      %p267 = por %p265, %p266
      %p268 = scmp.ne.s32.totalorder %s254, %s255
      %p269 = scmp.eq.s32.totalorder %s28, 1
      %p270 = por %p268, %p269
      %p272 = scmp.ne.s32.totalorder %s255, %s271
      %p273 = scmp.eq.s32.totalorder %s28, 0
      %p274 = por %p272, %p273
      %s275 = ssub.s32 %s22, %s29
      %p276 = scmp.eq.s32.totalorder %s275, 0
      %s278 = sadd.s32 %s277, 1
      %s279 = scalar_select %p276, %s277, %s278
      %p282 = pneg %p276
      %p283 = scmp.eq.s32.totalorder %s22, 1
      %p284 = por %p282, %p283
      %p285 = scmp.ne.s32.totalorder %s277, %s280
      %p286 = scmp.eq.s32.totalorder %s22, 0
      %p287 = por %p285, %p286
      %p288 = scmp.ne.s32.totalorder %s277, %s280
      %p289 = scmp.eq.s32.totalorder %s27, 1
      %p290 = por %p288, %p289
      %p291 = scmp.ne.s32.totalorder %s280, %s281
      %p292 = scmp.eq.s32.totalorder %s27, 0
      %p293 = por %p291, %p292
      %p294 = scmp.ne.s32.totalorder %s280, %s281
      %p295 = scmp.eq.s32.totalorder %s28, 1
      %p296 = por %p294, %p295
      %p298 = scmp.ne.s32.totalorder %s281, %s297
      %p299 = scmp.eq.s32.totalorder %s28, 0
      %p300 = por %p298, %p299
      %s301 = ssub.s32 %s22, %s29
      %p302 = scmp.eq.s32.totalorder %s301, 0
      %s304 = sadd.s32 %s303, 1
      %s305 = scalar_select %p302, %s303, %s304
      %p308 = pneg %p302
      %p309 = scmp.eq.s32.totalorder %s22, 1
      %p310 = por %p308, %p309
      %p311 = scmp.ne.s32.totalorder %s303, %s306
      %p312 = scmp.eq.s32.totalorder %s22, 0
      %p313 = por %p311, %p312
      %p314 = scmp.ne.s32.totalorder %s303, %s306
      %p315 = scmp.eq.s32.totalorder %s27, 1
      %p316 = por %p314, %p315
      %p317 = scmp.ne.s32.totalorder %s306, %s307
      %p318 = scmp.eq.s32.totalorder %s27, 0
      %p319 = por %p317, %p318
      %p320 = scmp.ne.s32.totalorder %s306, %s307
      %p321 = scmp.eq.s32.totalorder %s28, 1
      %p322 = por %p320, %p321
      %p324 = scmp.ne.s32.totalorder %s307, %s323
      %p325 = scmp.eq.s32.totalorder %s28, 0
      %p326 = por %p324, %p325
      %s327 = ssub.s32 %s22, %s29
      %p328 = scmp.eq.s32.totalorder %s327, 0
      %s330 = sadd.s32 %s329, 1
      %s331 = scalar_select %p328, %s329, %s330
      %p334 = pneg %p328
      %p335 = scmp.eq.s32.totalorder %s22, 1
      %p336 = por %p334, %p335
      %p337 = scmp.ne.s32.totalorder %s329, %s332
      %p338 = scmp.eq.s32.totalorder %s22, 0
      %p339 = por %p337, %p338
      %p340 = scmp.ne.s32.totalorder %s329, %s332
      %p341 = scmp.eq.s32.totalorder %s27, 1
      %p342 = por %p340, %p341
      %p343 = scmp.ne.s32.totalorder %s332, %s333
      %p344 = scmp.eq.s32.totalorder %s27, 0
      %p345 = por %p343, %p344
      %p346 = scmp.ne.s32.totalorder %s332, %s333
      %p347 = scmp.eq.s32.totalorder %s28, 1
      %p348 = por %p346, %p347
      %p350 = scmp.ne.s32.totalorder %s333, %s349
      %p351 = scmp.eq.s32.totalorder %s28, 0
      %p352 = por %p350, %p351
      %s353 = ssub.s32 %s22, %s29
      %p354 = scmp.eq.s32.totalorder %s353, 0
      %s356 = sadd.s32 %s355, 1
      %s357 = scalar_select %p354, %s355, %s356
      %p360 = pneg %p354
      %p361 = scmp.eq.s32.totalorder %s22, 1
      %p362 = por %p360, %p361
      %p363 = scmp.ne.s32.totalorder %s355, %s358
      %p364 = scmp.eq.s32.totalorder %s22, 0
      %p365 = por %p363, %p364
      %p366 = scmp.ne.s32.totalorder %s355, %s358
      %p367 = scmp.eq.s32.totalorder %s27, 1
      %p368 = por %p366, %p367
      %p369 = scmp.ne.s32.totalorder %s358, %s359
      %p370 = scmp.eq.s32.totalorder %s27, 0
      %p371 = por %p369, %p370
      %p372 = scmp.ne.s32.totalorder %s358, %s359
      %p373 = scmp.eq.s32.totalorder %s28, 1
      %p374 = por %p372, %p373
      %p376 = scmp.ne.s32.totalorder %s359, %s375
      %p377 = scmp.eq.s32.totalorder %s28, 0
      %p378 = por %p376, %p377
      %s379 = ssub.s32 %s22, %s29
      %p380 = scmp.eq.s32.totalorder %s379, 0
      %s382 = sadd.s32 %s381, 1
      %s383 = scalar_select %p380, %s381, %s382
      %p386 = pneg %p380
      %p387 = scmp.eq.s32.totalorder %s22, 1
      %p388 = por %p386, %p387
      %p389 = scmp.ne.s32.totalorder %s381, %s384
      %p390 = scmp.eq.s32.totalorder %s22, 0
      %p391 = por %p389, %p390
      %p392 = scmp.ne.s32.totalorder %s381, %s384
      %p393 = scmp.eq.s32.totalorder %s27, 1
      %p394 = por %p392, %p393
      %p395 = scmp.ne.s32.totalorder %s384, %s385
      %p396 = scmp.eq.s32.totalorder %s27, 0
      %p397 = por %p395, %p396
      %p398 = scmp.ne.s32.totalorder %s384, %s385
      %p399 = scmp.eq.s32.totalorder %s28, 1
      %p400 = por %p398, %p399
      %p402 = scmp.ne.s32.totalorder %s385, %s401
      %p403 = scmp.eq.s32.totalorder %s28, 0
      %p404 = por %p402, %p403
      %s406 = sadd.s32 %s405, 1
      %p409 = scmp.eq.s32.totalorder %s22, 1
      %p410 = scmp.ne.s32.totalorder %s405, %s407
      %p411 = scmp.eq.s32.totalorder %s22, 0
      %p412 = por %p410, %p411
      %p413 = scmp.ne.s32.totalorder %s405, %s407
      %p414 = scmp.eq.s32.totalorder %s27, 1
      %p415 = por %p413, %p414
      %p416 = scmp.ne.s32.totalorder %s407, %s408
      %p417 = scmp.eq.s32.totalorder %s27, 0
      %p418 = por %p416, %p417
      %p419 = scmp.ne.s32.totalorder %s407, %s408
      %p420 = scmp.eq.s32.totalorder %s28, 1
      %p421 = por %p419, %p420
      %p423 = scmp.ne.s32.totalorder %s408, %s422
      %p424 = scmp.eq.s32.totalorder %s28, 0
      %p425 = por %p423, %p424
      %p426 = scmp.le.s32.totalorder 1, %s22
      %p427 = scmp.lt.s32.totalorder %s22, 3
      %p428 = pnand %p426, %p427
      %p429 = pneg %p428
      // Predicated region
      $region9: #{bert_forward.1} parent=5 // pred_check
        _
      $region10: #{bert_forward.1} parent=5 // pred_check_branch
        %431 = sbr.rel (%p428) target = $region12
      $region11: #{bert_forward.1} parent=5 // pred_region
        %s432 = ssub.s32 %s22, 1
        // Predicated region
        $region13: #{bert_forward.1} parent=11 // pred_check
          %p433 = pneg %p43
        $region14: #{bert_forward.1} parent=11 // pred_check_branch
          %435 = sbr.rel (%p433) target = $region16
        $region15: #{bert_forward.1} parent=11 // pred_region
          _
        $region16: #{bert_forward.1} parent=11 // pred_fallthru
          _
        // Predicated region
        $region17: #{bert_forward.1} parent=11 // pred_check
          %p436 = pneg %p64
        $region18: #{bert_forward.1} parent=11 // pred_check_branch
          %438 = sbr.rel (%p436) target = $region20
        $region19: #{bert_forward.1} parent=11 // pred_region
          _
        $region20: #{bert_forward.1} parent=11 // pred_fallthru
          _
        // Predicated region
        $region21: #{bert_forward.1} parent=11 // pred_check
          %p439 = pneg %p85
        $region22: #{bert_forward.1} parent=11 // pred_check_branch
          %441 = sbr.rel (%p439) target = $region24
        $region23: #{bert_forward.1} parent=11 // pred_region
          _
        $region24: #{bert_forward.1} parent=11 // pred_fallthru
          _
      $region12: #{bert_forward.1} parent=5 // pred_fallthru
        _
      %p442 = scmp.lt.s32.totalorder %s22, 2
      // Predicated region
      $region25: #{bert_forward.1} parent=5 // pred_check
        %p443 = pneg %p442
      $region26: #{bert_forward.1} parent=5 // pred_check_branch
        %445 = sbr.rel (%p443) target = $region28
      $region27: #{bert_forward.1} parent=5 // pred_region
        // Predicated region
        $region29: #{bert_forward.1} parent=27 // pred_check
          %p446 = pneg %p105
        $region30: #{bert_forward.1} parent=27 // pred_check_branch
          %448 = sbr.rel (%p446) target = $region32
        $region31: #{bert_forward.1} parent=27 // pred_region
          %p449 = scmp.lt.s32.totalorder %s22, 1
          %s450 = scalar_select %p449, %s22, 1
          %s451 = smul.addr %s450, 4
          %s452 = smul.addr %s451, 4
          %s453 = scalar_lea.vmem %s3, %s452
        $region32: #{bert_forward.1} parent=27 // pred_fallthru
          _
        // Predicated region
        $region33: #{bert_forward.1} parent=27 // pred_check
          %p454 = pneg %p131
        $region34: #{bert_forward.1} parent=27 // pred_check_branch
          %456 = sbr.rel (%p454) target = $region36
        $region35: #{bert_forward.1} parent=27 // pred_region
          %p457 = scmp.lt.s32.totalorder %s22, 1
          %s458 = scalar_select %p457, %s22, 1
          %s459 = scalar_lea.vmem %s4, %s458
        $region36: #{bert_forward.1} parent=27 // pred_fallthru
          _
        // Predicated region
        $region37: #{bert_forward.1} parent=27 // pred_check
          %p460 = pneg %p157
        $region38: #{bert_forward.1} parent=27 // pred_check_branch
          %462 = sbr.rel (%p460) target = $region40
        $region39: #{bert_forward.1} parent=27 // pred_region
          %p463 = scmp.lt.s32.totalorder %s22, 1
          %s464 = scalar_select %p463, %s22, 1
          %s465 = smul.addr %s464, 4
          %s466 = smul.addr %s465, 4
          %s467 = scalar_lea.vmem %s5, %s466
        $region40: #{bert_forward.1} parent=27 // pred_fallthru
          _
        // Predicated region
        $region41: #{bert_forward.1} parent=27 // pred_check
          %p468 = pneg %p183
        $region42: #{bert_forward.1} parent=27 // pred_check_branch
          %470 = sbr.rel (%p468) target = $region44
        $region43: #{bert_forward.1} parent=27 // pred_region
          %p471 = scmp.lt.s32.totalorder %s22, 1
          %s472 = scalar_select %p471, %s22, 1
          %s473 = scalar_lea.vmem %s6, %s472
        $region44: #{bert_forward.1} parent=27 // pred_fallthru
          _
        // Predicated region
        $region45: #{bert_forward.1} parent=27 // pred_check
          %p474 = pneg %p209
        $region46: #{bert_forward.1} parent=27 // pred_check_branch
          %476 = sbr.rel (%p474) target = $region48
        $region47: #{bert_forward.1} parent=27 // pred_region
          %p477 = scmp.lt.s32.totalorder %s22, 1
          %s478 = scalar_select %p477, %s22, 1
          %s479 = scalar_lea.vmem %s7, %s478
        $region48: #{bert_forward.1} parent=27 // pred_fallthru
          _
        // Predicated region
        $region49: #{bert_forward.1} parent=27 // pred_check
          %p480 = pneg %p235
        $region50: #{bert_forward.1} parent=27 // pred_check_branch
          %482 = sbr.rel (%p480) target = $region52
        $region51: #{bert_forward.1} parent=27 // pred_region
          %p483 = scmp.lt.s32.totalorder %s22, 1
          %s484 = scalar_select %p483, %s22, 1
          %s485 = scalar_lea.vmem %s8, %s484
        $region52: #{bert_forward.1} parent=27 // pred_fallthru
          _
        // Predicated region
        $region53: #{bert_forward.1} parent=27 // pred_check
          %p486 = pneg %p261
        $region54: #{bert_forward.1} parent=27 // pred_check_branch
          %488 = sbr.rel (%p486) target = $region56
        $region55: #{bert_forward.1} parent=27 // pred_region
          %p489 = scmp.lt.s32.totalorder %s22, 1
          %s490 = scalar_select %p489, %s22, 1
          %s491 = smul.addr %s490, 4
          %s492 = smul.addr %s491, 4
          %s493 = scalar_lea.vmem %s9, %s492
        $region56: #{bert_forward.1} parent=27 // pred_fallthru
          _
        // Predicated region
        $region57: #{bert_forward.1} parent=27 // pred_check
          %p494 = pneg %p287
        $region58: #{bert_forward.1} parent=27 // pred_check_branch
          %496 = sbr.rel (%p494) target = $region60
        $region59: #{bert_forward.1} parent=27 // pred_region
          %p497 = scmp.lt.s32.totalorder %s22, 1
          %s498 = scalar_select %p497, %s22, 1
          %s499 = scalar_lea.vmem %s10, %s498
        $region60: #{bert_forward.1} parent=27 // pred_fallthru
          _
        // Predicated region
        $region61: #{bert_forward.1} parent=27 // pred_check
          %p500 = pneg %p313
        $region62: #{bert_forward.1} parent=27 // pred_check_branch
          %502 = sbr.rel (%p500) target = $region64
        $region63: #{bert_forward.1} parent=27 // pred_region
          %p503 = scmp.lt.s32.totalorder %s22, 1
          %s504 = scalar_select %p503, %s22, 1
          %s505 = smul.addr %s504, 16
          %s506 = smul.addr %s505, 4
          %s507 = scalar_lea.vmem %s11, %s506
        $region64: #{bert_forward.1} parent=27 // pred_fallthru
          _
        // Predicated region
        $region65: #{bert_forward.1} parent=27 // pred_check
          %p508 = pneg %p339
        $region66: #{bert_forward.1} parent=27 // pred_check_branch
          %510 = sbr.rel (%p508) target = $region68
        $region67: #{bert_forward.1} parent=27 // pred_region
          %p511 = scmp.lt.s32.totalorder %s22, 1
          %s512 = scalar_select %p511, %s22, 1
          %s513 = scalar_lea.vmem %s12, %s512
        $region68: #{bert_forward.1} parent=27 // pred_fallthru
          _
        // Predicated region
        $region69: #{bert_forward.1} parent=27 // pred_check
          %p514 = pneg %p365
        $region70: #{bert_forward.1} parent=27 // pred_check_branch
          %516 = sbr.rel (%p514) target = $region72
        $region71: #{bert_forward.1} parent=27 // pred_region
          %p517 = scmp.lt.s32.totalorder %s22, 1
          %s518 = scalar_select %p517, %s22, 1
          %s519 = scalar_lea.vmem %s13, %s518
        $region72: #{bert_forward.1} parent=27 // pred_fallthru
          _
        // Predicated region
        $region73: #{bert_forward.1} parent=27 // pred_check
          %p520 = pneg %p391
        $region74: #{bert_forward.1} parent=27 // pred_check_branch
          %522 = sbr.rel (%p520) target = $region76
        $region75: #{bert_forward.1} parent=27 // pred_region
          %p523 = scmp.lt.s32.totalorder %s22, 1
          %s524 = scalar_select %p523, %s22, 1
          %s525 = scalar_lea.vmem %s14, %s524
        $region76: #{bert_forward.1} parent=27 // pred_fallthru
          _
      $region28: #{bert_forward.1} parent=5 // pred_fallthru
        _
      %p526 = scmp.le.s32.totalorder 1, %s22
      %p527 = scmp.lt.s32.totalorder %s22, 3
      %p528 = pnand %p526, %p527
      %p529 = pneg %p528
      // Predicated region
      $region77: #{bert_forward.1} parent=5 // pred_check
        _
      $region78: #{bert_forward.1} parent=5 // pred_check_branch
        %531 = sbr.rel (%p528) target = $region80
      $region79: #{bert_forward.1} parent=5 // pred_region
        %s532 = ssub.s32 %s22, 1
        %p533 = pneg %p43
        %p534 = pneg %p40
        %p535 = pneg %p64
        %p536 = pneg %p61
        %p537 = pneg %p85
        %p538 = pneg %p82
        %p539 = scmp.lt.s32.totalorder %s27, 1
        %s540 = scalar_select %p539, %s27, 1
        %s541 = smul.addr %s540, 4
        %s542 = smul.addr %s541, 4
        %s543 = scalar_lea.vmem %s3, %s542
        %p544 = pneg %p111
        %p545 = pneg %p108
        %p546 = scmp.lt.s32.totalorder %s27, 1
        %s547 = scalar_select %p546, %s27, 1
        %s548 = scalar_lea.vmem %s4, %s547
        %p549 = pneg %p137
        %p550 = pneg %p134
        %p551 = scmp.lt.s32.totalorder %s27, 1
        %s552 = scalar_select %p551, %s27, 1
        %s553 = smul.addr %s552, 4
        %s554 = smul.addr %s553, 4
        %s555 = scalar_lea.vmem %s5, %s554
        %p556 = pneg %p163
        %p557 = pneg %p160
        %p558 = scmp.lt.s32.totalorder %s27, 1
        %s559 = scalar_select %p558, %s27, 1
        %s560 = scalar_lea.vmem %s6, %s559
        %p561 = pneg %p189
        %p562 = pneg %p186
        %p563 = scmp.lt.s32.totalorder %s27, 1
        %s564 = scalar_select %p563, %s27, 1
        %s565 = scalar_lea.vmem %s7, %s564
        %p566 = pneg %p215
        %p567 = pneg %p212
        %p568 = scmp.lt.s32.totalorder %s27, 1
        %s569 = scalar_select %p568, %s27, 1
        %s570 = scalar_lea.vmem %s8, %s569
        %p571 = pneg %p241
        %p572 = pneg %p238
        %p573 = scmp.lt.s32.totalorder %s27, 1
        %s574 = scalar_select %p573, %s27, 1
        %s575 = smul.addr %s574, 4
        %s576 = smul.addr %s575, 4
        %s577 = scalar_lea.vmem %s9, %s576
        %p578 = pneg %p267
        %p579 = pneg %p264
        %p580 = scmp.lt.s32.totalorder %s27, 1
        %s581 = scalar_select %p580, %s27, 1
        %s582 = scalar_lea.vmem %s10, %s581
        %p583 = pneg %p293
        %p584 = pneg %p290
        %p585 = scmp.lt.s32.totalorder %s27, 1
        %s586 = scalar_select %p585, %s27, 1
        %s587 = smul.addr %s586, 16
        %s588 = smul.addr %s587, 4
        %s589 = scalar_lea.vmem %s11, %s588
        %p590 = pneg %p319
        %p591 = pneg %p316
        %p592 = scmp.lt.s32.totalorder %s27, 1
        %s593 = scalar_select %p592, %s27, 1
        %s594 = scalar_lea.vmem %s12, %s593
        %p595 = pneg %p345
        %p596 = pneg %p342
        %p597 = scmp.lt.s32.totalorder %s27, 1
        %s598 = scalar_select %p597, %s27, 1
        %s599 = scalar_lea.vmem %s13, %s598
        %p600 = pneg %p371
        %p601 = pneg %p368
        %p602 = scmp.lt.s32.totalorder %s27, 1
        %s603 = scalar_select %p602, %s27, 1
        %s604 = scalar_lea.vmem %s14, %s603
        %p605 = pneg %p397
        %p606 = pneg %p394
        %p607 = pneg %p418
        %p608 = pneg %p415
        %p609 = scmp.lt.s32.totalorder %s27, 1
        %s610 = scalar_select %p609, %s27, 1
        %s611 = smul.addr %s610, 4
        %s612 = smul.addr %s611, 4
        %s613 = scalar_lea.vmem %s3, %s612
        %p614 = scmp.lt.s32.totalorder %s27, 1
        %s615 = scalar_select %p614, %s27, 1
        %s616 = scalar_lea.vmem %s4, %s615
        %p617 = scmp.lt.s32.totalorder %s27, 1
        %s618 = scalar_select %p617, %s27, 1
        %s619 = smul.addr %s618, 4
        %s620 = smul.addr %s619, 4
        %s621 = scalar_lea.vmem %s5, %s620
        %p622 = scmp.lt.s32.totalorder %s27, 1
        %s623 = scalar_select %p622, %s27, 1
        %s624 = scalar_lea.vmem %s6, %s623
        %p625 = scmp.lt.s32.totalorder %s27, 1
        %s626 = scalar_select %p625, %s27, 1
        %s627 = scalar_lea.vmem %s7, %s626
        %p628 = scmp.lt.s32.totalorder %s27, 1
        %s629 = scalar_select %p628, %s27, 1
        %s630 = scalar_lea.vmem %s8, %s629
        %p631 = scmp.lt.s32.totalorder %s27, 1
        %s632 = scalar_select %p631, %s27, 1
        %s633 = smul.addr %s632, 4
        %s634 = smul.addr %s633, 4
        %s635 = scalar_lea.vmem %s9, %s634
        %p636 = scmp.lt.s32.totalorder %s27, 1
        %s637 = scalar_select %p636, %s27, 1
        %s638 = scalar_lea.vmem %s10, %s637
        %p639 = scmp.lt.s32.totalorder %s27, 1
        %s640 = scalar_select %p639, %s27, 1
        %s641 = smul.addr %s640, 16
        %s642 = smul.addr %s641, 4
        %s643 = scalar_lea.vmem %s11, %s642
        %p644 = scmp.lt.s32.totalorder %s27, 1
        %s645 = scalar_select %p644, %s27, 1
        %s646 = scalar_lea.vmem %s12, %s645
        %p647 = scmp.lt.s32.totalorder %s27, 1
        %s648 = scalar_select %p647, %s27, 1
        %s649 = scalar_lea.vmem %s13, %s648
        %p650 = scmp.lt.s32.totalorder %s27, 1
        %s651 = scalar_select %p650, %s27, 1
        %s652 = scalar_lea.vmem %s14, %s651
        %p654 = scmp.eq.s32.totalorder %s27, 0
        // Predicated region
        $region81: #{bert_forward.1} parent=79 // pred_check
          %p655 = pneg %p654
        $region82: #{bert_forward.1} parent=79 // pred_check_branch
          %657 = sbr.rel (%p655) target = $region84
        $region83: #{bert_forward.1} parent=79 // pred_region
          %v658 = vld [vmem:[%s0] sm:$0xff]
          %v659 = vld [vmem:[%s1] sm:$0xff]
          %v660 = vadd.f32 %v658, %v659
          %v661 = vld [vmem:[%s2] sm:$0xff]
          %v662 = vadd.f32 %v660, %v661
          %vm663 = vcmask 261120
          %664 = vst.msk [vmem:[#allocation2] sm:$0xff] %vm663, %v662
        $region84: #{bert_forward.1} parent=79 // pred_fallthru
          _
        %v665 = vld [vmem:[#allocation2] sm:$0xff]
        %v666 = vld [vmem:[%s613] sm:$0xf]
        %v667 = vld [vmem:[%s613 + $0x4] sm:$0xf]
        %v668 = vld [vmem:[%s613 + $0x8] sm:$0xf]
        %v669 = vld [vmem:[%s613 + $0xc] sm:$0xf]
        %v670 = vld [vmem:[%s616] sm:$0x1]
        %v671 = vld [vmem:[%s621] sm:$0xf]
        %v672 = vld [vmem:[%s621 + $0x4] sm:$0xf]
        %v673 = vld [vmem:[%s621 + $0x8] sm:$0xf]
        %v674 = vld [vmem:[%s621 + $0xc] sm:$0xf]
        %v675 = vld [vmem:[%s624] sm:$0x1]
        %v676 = vld [vmem:[%s627] sm:$0x1]
        %v677 = vld [vmem:[%s630] sm:$0x1]
        %v678 = vld [vmem:[%s635] sm:$0xf]
        %v679 = vld [vmem:[%s635 + $0x4] sm:$0xf]
        %v680 = vld [vmem:[%s635 + $0x8] sm:$0xf]
        %v681 = vld [vmem:[%s635 + $0xc] sm:$0xf]
        %v682 = vld [vmem:[%s638] sm:$0x1]
        %v683 = vld [vmem:[%s643] sm:$0xf]
        %v684 = vld [vmem:[%s643 + $0x4] sm:$0xf]
        %v685 = vld [vmem:[%s643 + $0x8] sm:$0xf]
        %v686 = vld [vmem:[%s643 + $0xc] sm:$0xf]
        %v687 = vld [vmem:[%s643 + $0x10] sm:$0xf]
        %v688 = vld [vmem:[%s643 + $0x14] sm:$0xf]
        %v689 = vld [vmem:[%s643 + $0x18] sm:$0xf]
        %v690 = vld [vmem:[%s643 + $0x1c] sm:$0xf]
        %v691 = vld [vmem:[%s643 + $0x20] sm:$0xf]
        %v692 = vld [vmem:[%s643 + $0x24] sm:$0xf]
        %v693 = vld [vmem:[%s643 + $0x28] sm:$0xf]
        %v694 = vld [vmem:[%s643 + $0x2c] sm:$0xf]
        %v695 = vld [vmem:[%s643 + $0x30] sm:$0xf]
        %v696 = vld [vmem:[%s643 + $0x34] sm:$0xf]
        %v697 = vld [vmem:[%s643 + $0x38] sm:$0xf]
        %v698 = vld [vmem:[%s643 + $0x3c] sm:$0xf]
        %v699 = vld [vmem:[%s646] sm:$0x1]
        %v700 = vld [vmem:[%s649] sm:$0x1]
        %v701 = vld [vmem:[%s652] sm:$0x1]
        %v702 = vpack.c.bf16 %v665, %v665
        %v704 = vperm.slane %v670, 0
        %v710 = vunpack.c.l.b16 %v666
        %v711 = vunpack.c.l.b16 %v667
        %v712 = vunpack.c.l.b16 %v668
        %v713 = vunpack.c.l.b16 %v669
        %v714 = vpack.c.b16 %v711, %v710
        %v715 = vpack.c.b16 %v713, %v712
        %vm718 = vcmask 261120
        %v720 = vsel %vm718, %v702, 0
        %722 = vmatpush.bf16.msra.mxu0 0
        %723 = vmatpush.bf16.msra.mxu0 0
        %724 = vmatpush.bf16.msra.mxu0 0
        %725 = vmatpush.bf16.msra.mxu0 0
        %726 = vmatpush.bf16.msra.mxu0 0
        %727 = vmatpush.bf16.msra.mxu0 0
        %728 = vmatpush.bf16.msra.mxu0 %v715
        %729 = vmatpush.bf16.msra.mxu0 %v714
        %730 = vmatmul.bf16.gmra.mxu0 %v720
        %v731 = vpop.f32.mrf.mxu0
        %v732 = vadd.f32 %v704, %v731
        %v733 = vpop.f32.mrf.mxu0
        %734 = vdwg.mxu0
        %v735 = vmul.f32 %v732, 0.35355338
        %v736 = vpack.c.bf16 %v735, %v735
        %v737 = vpack.c.bf16 %v732, %v732
        %739 = vrot.lane.b32.xlu0 %v737, 96
        %v740 = vpop.permute.xlu0 %739
        %vm741 = vcmask 64512
        %v743 = vsel %vm741, %v736, 0
        %v746 = vsel %vm741, %v740, 0
        %748 = vmatpush.bf16.xpose.msra.mxu0 0
        %749 = vmatpush.bf16.xpose.msra.mxu0 0
        %750 = vmatpush.bf16.xpose.msra.mxu0 0
        %751 = vmatpush.bf16.xpose.msra.mxu0 0
        %752 = vmatpush.bf16.xpose.msra.mxu0 0
        %753 = vmatpush.bf16.xpose.msra.mxu0 0
        %754 = vmatpush.bf16.xpose.msra.mxu0 0
        %755 = vmatpush.bf16.xpose.msra.mxu0 %v746
        %756 = vmatmul.bf16.gmra.mxu0 %v743
        %v757 = vpop.f32.mrf.mxu0
        %v758 = vadd.f32 0.0, %v757
        %v759 = vpop.f32.mrf.mxu0
        %760 = vdwg.mxu0
        %v761 = vsel %vm741, %v758, -inf
        %762 = vmax.xlane.f32.xlu0 %v761
        %v763 = vpop.xlane.xlu0 %762
        %v764 = vsub.f32 %v758, %v763
        %v765 = vmul.f32 %v764, 1.442695
        %v766 = vpow.pop %v765
        %v767 = vsel %vm741, %v766, 0.0
        %768 = vadd.xlane.f32.xlu0 %v767
        %v769 = vpop.xlane.xlu0 %768
        %v770 = vrcp.pop %v769
        %v771 = vmul.f32 %v766, %v770
        %v772 = vpack.c.bf16 %v771, %v771
        %773 = vrot.lane.b32.xlu0 %v737, 64
        %v774 = vpop.permute.xlu0 %773
        %v776 = vsel %vm741, %v772, 0
        %vm778 = vcmask 1043456
        %v780 = vsel %vm778, %v774, 0
        %782 = vmatpush.bf16.msra.mxu0 0
        %783 = vmatpush.bf16.msra.mxu0 0
        %784 = vmatpush.bf16.msra.mxu0 0
        %785 = vmatpush.bf16.msra.mxu0 0
        %786 = vmatpush.bf16.msra.mxu0 0
        %787 = vmatpush.bf16.msra.mxu0 0
        %788 = vmatpush.bf16.msra.mxu0 0
        %789 = vmatpush.bf16.msra.mxu0 %v780
        %790 = vmatmul.bf16.gmra.mxu0 %v776
        %v791 = vpop.f32.mrf.mxu0
        %v792 = vadd.f32 0.0, %v791
        %v793 = vpop.f32.mrf.mxu0
        %794 = vdwg.mxu0
        %796 = vrot.lane.b32.xlu0 %v736, 120
        %v797 = vpop.permute.xlu0 %796
        %798 = vrot.lane.b32.xlu0 %v737, 88
        %v799 = vpop.permute.xlu0 %798
        %v801 = vsel %vm741, %v797, 0
        %v804 = vsel %vm741, %v799, 0
        %806 = vmatpush.bf16.xpose.msra.mxu0 0
        %807 = vmatpush.bf16.xpose.msra.mxu0 0
        %808 = vmatpush.bf16.xpose.msra.mxu0 0
        %809 = vmatpush.bf16.xpose.msra.mxu0 0
        %810 = vmatpush.bf16.xpose.msra.mxu0 0
        %811 = vmatpush.bf16.xpose.msra.mxu0 0
        %812 = vmatpush.bf16.xpose.msra.mxu0 0
        %813 = vmatpush.bf16.xpose.msra.mxu0 %v804
        %814 = vmatmul.bf16.gmra.mxu0 %v801
        %v815 = vpop.f32.mrf.mxu0
        %v816 = vadd.f32 0.0, %v815
        %v817 = vpop.f32.mrf.mxu0
        %818 = vdwg.mxu0
        %v819 = vsel %vm741, %v816, -inf
        %820 = vmax.xlane.f32.xlu0 %v819
        %v821 = vpop.xlane.xlu0 %820
        %v822 = vsub.f32 %v816, %v821
        %v823 = vmul.f32 %v822, 1.442695
        %v824 = vpow.pop %v823
        %v825 = vsel %vm741, %v824, 0.0
        %826 = vadd.xlane.f32.xlu0 %v825
        %v827 = vpop.xlane.xlu0 %826
        %v828 = vrcp.pop %v827
        %v829 = vmul.f32 %v824, %v828
        %v830 = vpack.c.bf16 %v829, %v829
        %831 = vrot.lane.b32.xlu0 %v737, 56
        %v832 = vpop.permute.xlu0 %831
        %v834 = vsel %vm741, %v830, 0
        %v837 = vsel %vm778, %v832, 0
        %839 = vmatpush.bf16.msra.mxu0 0
        %840 = vmatpush.bf16.msra.mxu0 0
        %841 = vmatpush.bf16.msra.mxu0 0
        %842 = vmatpush.bf16.msra.mxu0 0
        %843 = vmatpush.bf16.msra.mxu0 0
        %844 = vmatpush.bf16.msra.mxu0 0
        %845 = vmatpush.bf16.msra.mxu0 0
        %846 = vmatpush.bf16.msra.mxu0 %v837
        %847 = vmatmul.bf16.gmra.mxu0 %v834
        %v848 = vpop.f32.mrf.mxu0
        %v849 = vadd.f32 0.0, %v848
        %v850 = vpop.f32.mrf.mxu0
        %851 = vdwg.mxu0
        %852 = vrot.lane.b32.xlu0 %v736, 112
        %v853 = vpop.permute.xlu0 %852
        %854 = vrot.lane.b32.xlu0 %v737, 80
        %v855 = vpop.permute.xlu0 %854
        %v857 = vsel %vm741, %v853, 0
        %v860 = vsel %vm741, %v855, 0
        %862 = vmatpush.bf16.xpose.msra.mxu0 0
        %863 = vmatpush.bf16.xpose.msra.mxu0 0
        %864 = vmatpush.bf16.xpose.msra.mxu0 0
        %865 = vmatpush.bf16.xpose.msra.mxu0 0
        %866 = vmatpush.bf16.xpose.msra.mxu0 0
        %867 = vmatpush.bf16.xpose.msra.mxu0 0
        %868 = vmatpush.bf16.xpose.msra.mxu0 0
        %869 = vmatpush.bf16.xpose.msra.mxu0 %v860
        %870 = vmatmul.bf16.gmra.mxu0 %v857
        %v871 = vpop.f32.mrf.mxu0
        %v872 = vadd.f32 0.0, %v871
        %v873 = vpop.f32.mrf.mxu0
        %874 = vdwg.mxu0
        %v875 = vsel %vm741, %v872, -inf
        %876 = vmax.xlane.f32.xlu0 %v875
        %v877 = vpop.xlane.xlu0 %876
        %v878 = vsub.f32 %v872, %v877
        %v879 = vmul.f32 %v878, 1.442695
        %v880 = vpow.pop %v879
        %v881 = vsel %vm741, %v880, 0.0
        %882 = vadd.xlane.f32.xlu0 %v881
        %v883 = vpop.xlane.xlu0 %882
        %v884 = vrcp.pop %v883
        %v885 = vmul.f32 %v880, %v884
        %v886 = vpack.c.bf16 %v885, %v885
        %887 = vrot.lane.b32.xlu0 %v737, 48
        %v888 = vpop.permute.xlu0 %887
        %v890 = vsel %vm741, %v886, 0
        %v893 = vsel %vm778, %v888, 0
        %895 = vmatpush.bf16.msra.mxu0 0
        %896 = vmatpush.bf16.msra.mxu0 0
        %897 = vmatpush.bf16.msra.mxu0 0
        %898 = vmatpush.bf16.msra.mxu0 0
        %899 = vmatpush.bf16.msra.mxu0 0
        %900 = vmatpush.bf16.msra.mxu0 0
        %901 = vmatpush.bf16.msra.mxu0 0
        %902 = vmatpush.bf16.msra.mxu0 %v893
        %903 = vmatmul.bf16.gmra.mxu0 %v890
        %v904 = vpop.f32.mrf.mxu0
        %v905 = vadd.f32 0.0, %v904
        %v906 = vpop.f32.mrf.mxu0
        %907 = vdwg.mxu0
        %908 = vrot.lane.b32.xlu0 %v736, 104
        %v909 = vpop.permute.xlu0 %908
        %910 = vrot.lane.b32.xlu0 %v737, 72
        %v911 = vpop.permute.xlu0 %910
        %v913 = vsel %vm741, %v909, 0
        %v916 = vsel %vm741, %v911, 0
        %918 = vmatpush.bf16.xpose.msra.mxu0 0
        %919 = vmatpush.bf16.xpose.msra.mxu0 0
        %920 = vmatpush.bf16.xpose.msra.mxu0 0
        %921 = vmatpush.bf16.xpose.msra.mxu0 0
        %922 = vmatpush.bf16.xpose.msra.mxu0 0
        %923 = vmatpush.bf16.xpose.msra.mxu0 0
        %924 = vmatpush.bf16.xpose.msra.mxu0 0
        %925 = vmatpush.bf16.xpose.msra.mxu0 %v916
        %926 = vmatmul.bf16.gmra.mxu0 %v913
        %v927 = vpop.f32.mrf.mxu0
        %v928 = vadd.f32 0.0, %v927
        %v929 = vpop.f32.mrf.mxu0
        %930 = vdwg.mxu0
        %v931 = vsel %vm741, %v928, -inf
        %932 = vmax.xlane.f32.xlu0 %v931
        %v933 = vpop.xlane.xlu0 %932
        %v934 = vsub.f32 %v928, %v933
        %v935 = vmul.f32 %v934, 1.442695
        %v936 = vpow.pop %v935
        %v937 = vsel %vm741, %v936, 0.0
        %938 = vadd.xlane.f32.xlu0 %v937
        %v939 = vpop.xlane.xlu0 %938
        %v940 = vrcp.pop %v939
        %v941 = vmul.f32 %v936, %v940
        %v942 = vpack.c.bf16 %v941, %v941
        %943 = vrot.lane.b32.xlu0 %v737, 40
        %v944 = vpop.permute.xlu0 %943
        %v946 = vsel %vm741, %v942, 0
        %v949 = vsel %vm778, %v944, 0
        %951 = vmatpush.bf16.msra.mxu0 0
        %952 = vmatpush.bf16.msra.mxu0 0
        %953 = vmatpush.bf16.msra.mxu0 0
        %954 = vmatpush.bf16.msra.mxu0 0
        %955 = vmatpush.bf16.msra.mxu0 0
        %956 = vmatpush.bf16.msra.mxu0 0
        %957 = vmatpush.bf16.msra.mxu0 0
        %958 = vmatpush.bf16.msra.mxu0 %v949
        %959 = vmatmul.bf16.gmra.mxu0 %v946
        %v960 = vpop.f32.mrf.mxu0
        %v961 = vadd.f32 0.0, %v960
        %v962 = vpop.f32.mrf.mxu0
        %963 = vdwg.mxu0
        %965 = vrot.lane.b32.xlu0 %v849, 8
        %v966 = vpop.permute.xlu0 %965
        %969 = vrot.lane.b32.xlu0 %v905, 16
        %v970 = vpop.permute.xlu0 %969
        %973 = vrot.lane.b32.xlu0 %v961, 24
        %v974 = vpop.permute.xlu0 %973
        %v976 = vsel %vm741, %v792, %v966
        %vm977 = vcmask 130048
        %v978 = vsel %vm977, %v976, %v970
        %vm979 = vcmask 195584
        %v980 = vsel %vm979, %v978, %v974
        %v981 = vpack.c.bf16 %v980, %v980
        %v983 = vperm.slane %v675, 0
        %v989 = vunpack.c.l.b16 %v671
        %v990 = vunpack.c.l.b16 %v672
        %v991 = vunpack.c.l.b16 %v673
        %v992 = vunpack.c.l.b16 %v674
        %v993 = vpack.c.b16 %v990, %v989
        %v994 = vpack.c.b16 %v992, %v991
        %v998 = vsel %vm718, %v981, 0
        %1000 = vmatpush.bf16.msra.mxu0 0
        %1001 = vmatpush.bf16.msra.mxu0 0
        %1002 = vmatpush.bf16.msra.mxu0 0
        %1003 = vmatpush.bf16.msra.mxu0 0
        %1004 = vmatpush.bf16.msra.mxu0 0
        %1005 = vmatpush.bf16.msra.mxu0 0
        %1006 = vmatpush.bf16.msra.mxu0 %v994
        %1007 = vmatpush.bf16.msra.mxu0 %v993
        %1008 = vmatmul.bf16.gmra.mxu0 %v998
        %v1009 = vpop.f32.mrf.mxu0
        %v1010 = vadd.f32 %v983, %v1009
        %v1011 = vpop.f32.mrf.mxu0
        %1012 = vdwg.mxu0
        %v1013 = vadd.f32 %v665, %v1010
        %v1014 = vsel %vm718, %v1013, 0.0
        %1015 = vadd.xlane.f32.xlu0 %v1014
        %v1016 = vpop.xlane.xlu0 %1015
        %v1017 = vrcp.pop 32.0
        %v1018 = vmul.f32 32.0, %v1017
        %v1019 = vsub.f32 1.0, %v1018
        %v1020 = vmul.f32 %v1017, %v1019
        %v1021 = vadd.f32 %v1017, %v1020
        %vm1022 = vweird.f32 %v1017
        %v1023 = vsel %vm1022, %v1017, %v1021
        %v1024 = vmul.f32 %v1016, %v1023
        %v1025 = vsub.f32 %v1013, %v1024
        %v1026 = vmul.f32 %v1025, %v1025
        %v1027 = vsel %vm718, %v1026, 0.0
        %1028 = vadd.xlane.f32.xlu0 %v1027
        %v1029 = vpop.xlane.xlu0 %1028
        %v1030 = vmul.f32 %v1029, %v1023
        %v1031 = vadd.f32 %v1030, 1e-05
        %v1032 = vrsqrt.pop %v1031
        %v1033 = vmul.f32 %v1032, %v1031
        %v1034 = vmul.f32 %v1033, %v1032
        %v1035 = vmul.f32 0.5, %v1034
        %v1036 = vsub.f32 1.5, %v1035
        %v1037 = vmul.f32 %v1032, %v1036
        %vm1038 = vweird.f32 %v1031
        %vm1039 = vweird.f32 %v1032
        %vm1040 = vmor %vm1038, %vm1039
        %v1041 = vsel %vm1040, %v1032, %v1037
        %v1042 = vmul.f32 %v1025, %v1041
        %v1044 = vperm.slane %v676, 0
        %v1046 = vmul.f32 %v1042, %v1044
        %v1048 = vperm.slane %v677, 0
        %v1050 = vadd.f32 %v1046, %v1048
        %v1051 = vpack.c.bf16 %v1050, %v1050
        %v1053 = vperm.slane %v682, 0
        %v1059 = vunpack.c.l.b16 %v678
        %v1060 = vunpack.c.l.b16 %v679
        %v1061 = vunpack.c.l.b16 %v680
        %v1062 = vunpack.c.l.b16 %v681
        %v1063 = vpack.c.b16 %v1060, %v1059
        %v1064 = vpack.c.b16 %v1062, %v1061
        %v1068 = vsel %vm718, %v1051, 0
        %1070 = vmatpush.bf16.msra.mxu0 0
        %1071 = vmatpush.bf16.msra.mxu0 0
        %1072 = vmatpush.bf16.msra.mxu0 0
        %1073 = vmatpush.bf16.msra.mxu0 0
        %1074 = vmatpush.bf16.msra.mxu0 0
        %1075 = vmatpush.bf16.msra.mxu0 0
        %1076 = vmatpush.bf16.msra.mxu0 %v1064
        %1077 = vmatpush.bf16.msra.mxu0 %v1063
        %1078 = vmatmul.bf16.gmra.mxu0 %v1068
        %v1079 = vpop.f32.mrf.mxu0
        %v1080 = vadd.f32 %v1053, %v1079
        %v1081 = vpop.f32.mrf.mxu0
        %1082 = vdwg.mxu0
        %v1083 = vmax.f32 %v1080, 0.0
        %v1084 = vpack.c.bf16 %v1083, %v1083
        %v1086 = vperm.slane %v699, 0
        %v1104 = vunpack.c.l.b16 %v683
        %v1105 = vunpack.c.l.b16 %v684
        %v1106 = vunpack.c.l.b16 %v685
        %v1107 = vunpack.c.l.b16 %v686
        %v1108 = vunpack.c.l.b16 %v687
        %v1109 = vunpack.c.l.b16 %v688
        %v1110 = vunpack.c.l.b16 %v689
        %v1111 = vunpack.c.l.b16 %v690
        %v1112 = vunpack.c.l.b16 %v691
        %v1113 = vunpack.c.l.b16 %v692
        %v1114 = vunpack.c.l.b16 %v693
        %v1115 = vunpack.c.l.b16 %v694
        %v1116 = vunpack.c.l.b16 %v695
        %v1117 = vunpack.c.l.b16 %v696
        %v1118 = vunpack.c.l.b16 %v697
        %v1119 = vunpack.c.l.b16 %v698
        %v1120 = vpack.c.b16 %v1105, %v1104
        %v1121 = vpack.c.b16 %v1107, %v1106
        %v1122 = vpack.c.b16 %v1109, %v1108
        %v1123 = vpack.c.b16 %v1111, %v1110
        %v1124 = vpack.c.b16 %v1113, %v1112
        %v1125 = vpack.c.b16 %v1115, %v1114
        %v1126 = vpack.c.b16 %v1117, %v1116
        %v1127 = vpack.c.b16 %v1119, %v1118
        %1136 = vmatpush.bf16.msra.mxu0 %v1127
        %1137 = vmatpush.bf16.msra.mxu0 %v1126
        %1138 = vmatpush.bf16.msra.mxu0 %v1125
        %1139 = vmatpush.bf16.msra.mxu0 %v1124
        %1140 = vmatpush.bf16.msra.mxu0 %v1123
        %1141 = vmatpush.bf16.msra.mxu0 %v1122
        %1142 = vmatpush.bf16.msra.mxu0 %v1121
        %1143 = vmatpush.bf16.msra.mxu0 %v1120
        %1144 = vmatmul.bf16.gmra.mxu0 %v1084
        %v1145 = vpop.f32.mrf.mxu0
        %v1146 = vadd.f32 %v1086, %v1145
        %v1147 = vpop.f32.mrf.mxu0
        %1148 = vdwg.mxu0
        %v1149 = vadd.f32 %v1050, %v1146
        %v1150 = vsel %vm718, %v1149, 0.0
        %1151 = vadd.xlane.f32.xlu0 %v1150
        %v1152 = vpop.xlane.xlu0 %1151
        %v1153 = vmul.f32 %v1152, %v1023
        %v1154 = vsub.f32 %v1149, %v1153
        %v1155 = vmul.f32 %v1154, %v1154
        %v1156 = vsel %vm718, %v1155, 0.0
        %1157 = vadd.xlane.f32.xlu0 %v1156
        %v1158 = vpop.xlane.xlu0 %1157
        %v1159 = vmul.f32 %v1158, %v1023
        %v1160 = vadd.f32 %v1159, 1e-05
        %v1161 = vrsqrt.pop %v1160
        %v1162 = vmul.f32 %v1161, %v1160
        %v1163 = vmul.f32 %v1162, %v1161
        %v1164 = vmul.f32 0.5, %v1163
        %v1165 = vsub.f32 1.5, %v1164
        %v1166 = vmul.f32 %v1161, %v1165
        %vm1167 = vweird.f32 %v1160
        %vm1168 = vweird.f32 %v1161
        %vm1169 = vmor %vm1167, %vm1168
        %v1170 = vsel %vm1169, %v1161, %v1166
        %v1171 = vmul.f32 %v1154, %v1170
        %v1173 = vperm.slane %v700, 0
        %v1175 = vmul.f32 %v1171, %v1173
        %v1177 = vperm.slane %v701, 0
        %v1179 = vadd.f32 %v1175, %v1177
        %1180 = vst.msk [vmem:[#allocation2] sm:$0xff] %vm718, %v1179
        // Predicated region
        $region85: #{bert_forward.1} parent=79 // pred_check
          %p1181 = pneg %p415
        $region86: #{bert_forward.1} parent=79 // pred_check_branch
          %1183 = sbr.rel (%p1181) target = $region88
        $region87: #{bert_forward.1} parent=79 // pred_region
          %1185 = vsyncadd [#allocation3], 0
          %s1187 = sshll.u32 [#allocation2], 4
          %s1188 = int_to_ptr.vmem [resolvable:$true] %s1187
          %s1189 = sshll.u32 %s15, 4
          %s1190 = int_to_ptr.hbm [resolvable:$true] %s1189
          %1192 = dma.vmem_to_hbm [thread:$0]  %s1188, 128, %s1190, [#allocation3]
        $region88: #{bert_forward.1} parent=79 // pred_fallthru
          _
        // Predicated region
        $region89: #{bert_forward.1} parent=79 // pred_check
          %p1193 = pneg %p415
        $region90: #{bert_forward.1} parent=79 // pred_check_branch
          %1195 = sbr.rel (%p1193) target = $region92
        $region91: #{bert_forward.1} parent=79 // pred_region
          %1197 = dma.done [#allocation3], 128
        $region92: #{bert_forward.1} parent=79 // pred_fallthru
          _
      $region80: #{bert_forward.1} parent=5 // pred_fallthru
        _
      %p1198 = scmp.le.s32.totalorder 2, %s22
      // Predicated region
      $region93: #{bert_forward.1} parent=5 // pred_check
        %p1199 = pneg %p1198
      $region94: #{bert_forward.1} parent=5 // pred_check_branch
        %1201 = sbr.rel (%p1199) target = $region96
      $region95: #{bert_forward.1} parent=5 // pred_region
        %s1202 = ssub.s32 %s22, 2
      $region96: #{bert_forward.1} parent=5 // pred_fallthru
        _
    $region6: #{bert_forward.1} parent=1 // loop_footer
      %s26 = sadd.s32 1, %s22
    $region7: #{bert_forward.1} parent=1 // loop_footer_branch
      %21 = sbr.rel target = $region3
    $region8: #{bert_forward.1} parent=1 // loop_exit
      _
    %1203 = vsyncpa [#allocation3], 1
    %s1204 = scalar_lea.sflag [#allocation3], 1
    %1205 = vsyncpa %s1204, 1

</llo_original>
